<compile_context>
chip_gen: v5e
topology: v5e:2x2
jax: 0.10.0
libtpu: 0.0.40
codegen_flags: <defaults>
</compile_context>

<pallas_src>
import math
from functools import partial

import jax
import jax.numpy as jnp
from jax.experimental import pallas as pl
from jax.experimental.pallas import tpu as pltpu


# -----------------------------------------------------------------------------
# Fused kernel: one (batch block, layer) grid step of the whole Transformer
# -----------------------------------------------------------------------------
def _transformer_kernel(
    x_ref,        # (B, L, E)   input sequences of this batch block
    vecs_ref,     # (1, 8, E)   f32: [ln1_w, ln1_b, ln2_w, ln2_b, b_o, b_proj, 0, 0]
    wqkv_ref,     # (1, E, 3E)  bf16 (q scale folded)
    bqkv_ref,     # (1, 1, 3E)  f32  (q scale folded)
    wo_ref,       # (1, E, E)   bf16
    wfc_ref,      # (1, E, 4E)  bf16
    bfc_ref,      # (1, 1, 4E)  f32
    wproj_ref,    # (1, 4E, E)  bf16
    y_ref,        # (B, L, E)   residual stream (VMEM-resident across the layer axis)
    attnw_ref,    # (B, L, L)   f32, written only for the last layer
    *, n_head: int, bf16_gelu: bool,
):
    layer = pl.program_id(1)
    n_layers = pl.num_programs(1)

    # First layer for this batch block: seed the VMEM-resident residual stream.
    @pl.when(layer == 0)
    def _():
        y_ref[...] = x_ref[...]

    B, L, E = y_ref.shape
    H = n_head
    D = E // H
    eps = 1e-5

    # Per-layer parameters: one weight fetch shared by all B sequences in this block.
    vecs = vecs_ref[0].astype(jnp.float32)            # (8, E)
    ln1_w, ln1_b = vecs[0:1], vecs[1:2]               # (1, E)
    ln2_w, ln2_b = vecs[2:3], vecs[3:4]
    b_o, b_proj = vecs[4:5], vecs[5:6]
    w_qkv = wqkv_ref[0]                               # (E, 3E) bf16, q-scale folded
    b_qkv = bqkv_ref[0].astype(jnp.float32)           # (1, 3E)
    w_o = wo_ref[0]                                   # (E, E)  bf16
    w_fc = wfc_ref[0]                                 # (E, 4E) bf16
    b_fc = bfc_ref[0].astype(jnp.float32)             # (1, 4E)
    w_proj = wproj_ref[0]                             # (4E, E) bf16

    def layer_norm(v, w, b):                          # f32 LayerNorm (LayerNorm.forward)
        mu = jnp.mean(v, axis=-1, keepdims=True)
        var = jnp.mean(jnp.square(v - mu), axis=-1, keepdims=True)
        return (v - mu) * jax.lax.rsqrt(var + eps) * w + b

    # Unrolled loop over the B sequences of this batch block: per-sequence 2-D matmuls
    # lower robustly for any L (no (8,128)-aligned reshape over the batch axis), while
    # every sequence reuses the single per-layer weight fetch above (the main win).
    for b in range(B):
        x = y_ref[b].astype(jnp.float32)              # (L, E) residual stream, f32 math

        # ---------------- attention branch ----------------
        h = layer_norm(x, ln1_w, ln1_b).astype(jnp.bfloat16)                 # (L, E)
        qkv = jnp.dot(h, w_qkv, preferred_element_type=jnp.float32) + b_qkv  # (L, 3E)

        def to_heads(t):   # (L, E) -> (H, L, D); head ordering matches PyTorch
            return jnp.transpose(t.reshape(L, H, D), (1, 0, 2))
        # TODO(synk): replace the head transposes with a lane-layout-aware pltpu.einshape.
        qh = to_heads(qkv[:, :E].astype(jnp.bfloat16))      # 1/sqrt(D) already folded in
        kh = to_heads(qkv[:, E:2 * E].astype(jnp.bfloat16))
        vh = to_heads(qkv[:, 2 * E:].astype(jnp.bfloat16))

        scores = jnp.einsum("hld,hmd->hlm", qh, kh,
                            preferred_element_type=jnp.float32)              # (H, L, L)
        # TODO(synk): attn_mask / key_padding_mask support (forward exercised with None).
        scores = scores - jnp.max(scores, axis=-1, keepdims=True)
        p = jnp.exp(scores)
        # Exact division: attn feeds ctx AND is a returned output compared against
        # PyTorch softmax, so no approximate reciprocal here.
        attn = p / jnp.sum(p, axis=-1, keepdims=True)

        ctx = jnp.einsum("hlm,hmd->hld", attn.astype(jnp.bfloat16), vh,
                         preferred_element_type=jnp.float32)                 # (H, L, D)
        ctx = jnp.transpose(ctx, (1, 0, 2)).reshape(L, E)

        attn_out = jnp.dot(ctx.astype(jnp.bfloat16), w_o,
                           preferred_element_type=jnp.float32) + b_o         # (L, E)
        x = x + attn_out

        # Only the last layer's head-averaged attention weights are consumed.
        @pl.when(layer == n_layers - 1)
        def _():
            attnw_ref[b] = jnp.mean(attn, axis=0)                            # (L, L)

        # ---------------- MLP branch ----------------
        h2 = layer_norm(x, ln2_w, ln2_b).astype(jnp.bfloat16)                # (L, E)
        fc = jnp.dot(h2, w_fc, preferred_element_type=jnp.float32) + b_fc    # (L, 4E)
        if bf16_gelu:
            fcb = fc.astype(jnp.bfloat16)              # bf16 EUP sigmoid on v6e/v7x
            gelu = fcb * jax.nn.sigmoid(fcb * 1.702)   # QuickGELU
        else:
            gelu = (fc * jax.nn.sigmoid(1.702 * fc)).astype(jnp.bfloat16)
        proj = jnp.dot(gelu, w_proj, preferred_element_type=jnp.float32) + b_proj
        x = x + proj

        y_ref[b] = x.astype(y_ref.dtype)


# -----------------------------------------------------------------------------
# Wrapper helpers
# -----------------------------------------------------------------------------
def _device_kind():
    try:
        return jax.devices()[0].device_kind.lower()
    except Exception:
        return ""


def _vmem_limit_bytes():
    # 7/8 of physical VMEM (~112 MiB v5e/v6e, ~56 MiB v7x); conservative fallback.
    try:
        return int(pltpu.get_tpu_info().vmem_capacity_bytes * 7 // 8)
    except Exception:
        return 48 * 1024 * 1024


def _pick_block_batch(n, kind):
    # Enough sequences per grid step to amortize the per-layer weight DMA; smaller on
    # v7x (half the VMEM of v5e/v6e).
    target = 2 if "v7" in kind else 4
    target = max(1, min(n, target))
    for cand in range(target, 0, -1):
        if n % cand == 0:
            return cand
    return 1


def _stack_params(layer_params, n_head):
    """Stack per-layer PyTorch-layout params into (LAYERS, ...) arrays:
       pre-transpose weights for x @ W, fuse QKV, fold the q scale, cast to bf16,
       consolidate LN scales/shifts and small biases into one (LAYERS, 8, E) array."""
    E = layer_params[0]["wq"].shape[0]
    D = E // n_head
    scale = 1.0 / math.sqrt(D)

    def stack(fn):
        return jnp.stack([fn(p) for p in layer_params])

    zero = jnp.zeros((E,), jnp.float32)
    vecs = stack(lambda p: jnp.stack([
        p["ln1_w"].reshape(E), p["ln1_b"].reshape(E),
        p["ln2_w"].reshape(E), p["ln2_b"].reshape(E),
        p["bo"].reshape(E), p["bproj"].reshape(E),
        zero, zero], axis=0)).astype(jnp.float32)                             # (LY,8,E)

    return dict(
        vecs=vecs,
        w_qkv=stack(lambda p: jnp.concatenate(
            [scale * p["wq"], p["wk"], p["wv"]], axis=0).T
        ).astype(jnp.bfloat16),                                               # (LY,E,3E)
        b_qkv=stack(lambda p: jnp.concatenate(
            [scale * p["bq"], p["bk"], p["bv"]], axis=-1)
        ).astype(jnp.float32),                                                # (LY,1,3E)
        w_o=stack(lambda p: p["wo"].T).astype(jnp.bfloat16),                  # (LY,E,E)
        w_fc=stack(lambda p: p["wfc"].T).astype(jnp.bfloat16),                # (LY,E,4E)
        b_fc=stack(lambda p: p["bfc"]).astype(jnp.float32),                   # (LY,1,4E)
        w_proj=stack(lambda p: p["wproj"].T).astype(jnp.bfloat16),            # (LY,4E,E)
    )


# -----------------------------------------------------------------------------
# Wrapper: stack per-layer weights, call the fused kernel once
# -----------------------------------------------------------------------------
def transformer_forward(x, layer_params, n_head, block_batch=None):
    """CLIP Transformer forward.

    x: (L, N, E) seq-first (like nn.MultiheadAttention without batch_first).
    Returns (y: (L, N, E), head-averaged attn weights of the LAST layer: (N, L, L)).
    """
    L, N, E = x.shape
    n_layers = len(layer_params)
    kind = _device_kind()

    if block_batch is None:
        block_batch = _pick_block_batch(N, kind)
    assert N % block_batch == 0, "block_batch must divide the batch size"
    B = block_batch

    sp = _stack_params(layer_params, n_head)
    xb = jnp.transpose(x, (1, 0, 2))                  # (N, L, E), batch-major, lane-dense E

    def wspec(arr):
        _, r, c = arr.shape
        return pl.BlockSpec((1, r, c), lambda b, l: (l, 0, 0))

    # TODO(synk): for E >= 1024 on v7x (64 MiB VMEM), stream w_fc/w_proj in chunks with
    # an inner pltpu.emit_pipeline instead of holding the full (E,4E)+(4E,E) tiles.
    in_specs = [
        pl.BlockSpec((B, L, E), lambda b, l: (b, 0, 0)),   # B sequences of batch block b
        wspec(sp["vecs"]),
        wspec(sp["w_qkv"]), wspec(sp["b_qkv"]),
        wspec(sp["w_o"]),
        wspec(sp["w_fc"]), wspec(sp["b_fc"]),
        wspec(sp["w_proj"]),
    ]
    out_specs = (
        pl.BlockSpec((B, L, E), lambda b, l: (b, 0, 0)),   # resident residual stream
        pl.BlockSpec((B, L, L), lambda b, l: (b, 0, 0)),   # last-layer attention weights
    )
    out_shape = (
        jax.ShapeDtypeStruct((N, L, E), x.dtype),
        jax.ShapeDtypeStruct((N, L, L), jnp.float32),
    )

    bf16_gelu = any(t in kind for t in ("v6", "v7"))       # f32 sigmoid on v5e & older

    y3d, attn_w = pl.pallas_call(
        partial(_transformer_kernel, n_head=n_head, bf16_gelu=bf16_gelu),
        out_shape=out_shape,
        grid_spec=pltpu.PrefetchScalarGridSpec(
            num_scalar_prefetch=0,
            grid=(N // B, n_layers),      # batch blocks (parallel) x layers (sequential)
            in_specs=in_specs,
            out_specs=out_specs,
        ),
        compiler_params=pltpu.CompilerParams(
            dimension_semantics=("parallel", "arbitrary"),
            vmem_limit_bytes=_vmem_limit_bytes(),
        ),
    )(
        xb,
        sp["vecs"],
        sp["w_qkv"], sp["b_qkv"],
        sp["w_o"],
        sp["w_fc"], sp["b_fc"],
        sp["w_proj"],
    )

    return jnp.transpose(y3d, (1, 0, 2)), attn_w


# -----------------------------------------------------------------------------
# Pure-JAX f32 reference (matches the PyTorch module) for a loose numeric check
# -----------------------------------------------------------------------------
def _reference_forward(x, layer_params, n_head):
    L, N, E = x.shape
    H = n_head
    D = E // H
    scale = 1.0 / math.sqrt(D)
    xb = jnp.transpose(x, (1, 0, 2)).astype(jnp.float32)   # (N, L, E)
    attn_w = None

    def ln(v, w, b):
        mu = jnp.mean(v, -1, keepdims=True)
        var = jnp.mean((v - mu) ** 2, -1, keepdims=True)
        return (v - mu) / jnp.sqrt(var + 1e-5) * w.reshape(E) + b.reshape(E)

    for p in layer_params:
        h = ln(xb, p["ln1_w"], p["ln1_b"])
        q = h @ p["wq"].T + p["bq"]
        k = h @ p["wk"].T + p["bk"]
        v = h @ p["wv"].T + p["bv"]

        def heads(t):   # (N, L, E) -> (N, H, L, D)
            return jnp.transpose(t.reshape(N, L, H, D), (0, 2, 1, 3))

        qh, kh, vh = heads(q) * scale, heads(k), heads(v)
        s = jnp.einsum("nhld,nhmd->nhlm", qh, kh)
        a = jax.nn.softmax(s, axis=-1)
        ctx = jnp.einsum("nhlm,nhmd->nhld", a, vh)
        ctx = jnp.transpose(ctx, (0, 2, 1, 3)).reshape(N, L, E)
        xb = xb + (ctx @ p["wo"].T + p["bo"])
        attn_w = jnp.mean(a, axis=1)

        h2 = ln(xb, p["ln2_w"], p["ln2_b"])
        fc = h2 @ p["wfc"].T + p["bfc"]
        gelu = fc * jax.nn.sigmoid(1.702 * fc)
        xb = xb + (gelu @ p["wproj"].T + p["bproj"])
    return jnp.transpose(xb, (1, 0, 2)), attn_w


# -----------------------------------------------------------------------------
# Deterministic parameter init (synthetic; shapes follow the nn.Module __init__)
# -----------------------------------------------------------------------------
def init_params(key, width, layers):
    E = width
    params = []
    for i in range(layers):
        k = jax.random.fold_in(key, i)
        ks = jax.random.split(k, 8)
        s = 0.02
        p = {
            "ln1_w": jnp.ones((1, E), jnp.float32),
            "ln1_b": jnp.zeros((1, E), jnp.float32),
            "wq": s * jax.random.normal(ks[0], (E, E), jnp.float32),
            "bq": jnp.zeros((1, E), jnp.float32),
            "wk": s * jax.random.normal(ks[1], (E, E), jnp.float32),
            "bk": jnp.zeros((1, E), jnp.float32),
            "wv": s * jax.random.normal(ks[2], (E, E), jnp.float32),
            "bv": jnp.zeros((1, E), jnp.float32),
            "wo": s * jax.random.normal(ks[3], (E, E), jnp.float32),
            "bo": jnp.zeros((1, E), jnp.float32),
            "ln2_w": jnp.ones((1, E), jnp.float32),
            "ln2_b": jnp.zeros((1, E), jnp.float32),
            "wfc": s * jax.random.normal(ks[4], (4 * E, E), jnp.float32),
            "bfc": jnp.zeros((1, 4 * E), jnp.float32),
            "wproj": s * jax.random.normal(ks[5], (E, 4 * E), jnp.float32),
            "bproj": jnp.zeros((1, E), jnp.float32),
        }
        params.append(p)
    return params


if __name__ == "__main__":
    # Small shapes: seq L=8, batch N=2, width E=32, heads=4, layers=2
    L, N, E, H, LAYERS = 8, 2, 32, 4, 2

    key = jax.random.PRNGKey(0)
    kx, kp = jax.random.split(key)
    x = jax.random.normal(kx, (L, N, E), jnp.float32)
    params = init_params(kp, E, LAYERS)

    y, attn_w = transformer_forward(x, params, n_head=H)
    jax.block_until_ready((y, attn_w))

    assert y.shape == (L, N, E)
    assert attn_w.shape == (N, L, L)
    assert bool(jnp.all(jnp.isfinite(y))) and bool(jnp.all(jnp.isfinite(attn_w)))

    # Loose check vs the pure-JAX f32 reference (kernel runs bf16 matmuls).
    y_ref_jax, aw_ref_jax = _reference_forward(x, params, n_head=H)
    assert float(jnp.max(jnp.abs(y - y_ref_jax))) < 5e-2
    assert float(jnp.max(jnp.abs(attn_w - aw_ref_jax))) < 2e-2

    print("KERNEL_OK")
</pallas_src>

<mosaic_0001>
module attributes {stable_mosaic.version = 11 : i64} {
  func.func @_transformer_kernel(%arg0: i32, %arg1: i32, %arg2: memref<2x8x32xf32, #tpu.memory_space<vmem>>, %arg3: memref<1x8x32xf32, #tpu.memory_space<vmem>>, %arg4: memref<1x32x96xbf16, #tpu.memory_space<vmem>>, %arg5: memref<1x1x96xf32, #tpu.memory_space<vmem>>, %arg6: memref<1x32x32xbf16, #tpu.memory_space<vmem>>, %arg7: memref<1x32x128xbf16, #tpu.memory_space<vmem>>, %arg8: memref<1x1x128xf32, #tpu.memory_space<vmem>>, %arg9: memref<1x128x32xbf16, #tpu.memory_space<vmem>>, %arg10: memref<2x8x32xf32, #tpu.memory_space<vmem>>, %arg11: memref<2x8x8xf32, #tpu.memory_space<vmem>>) attributes {dimension_semantics = [#tpu.dimension_semantics<parallel>, #tpu.dimension_semantics<arbitrary>], iteration_bounds = array<i64: 1, 2>, scalar_prefetch = 0 : i64, scratch_operands = 0 : i64, tpu.core_type = #tpu.core_type<tc>, window_params = [{transform_indices = @transform_0, window_bounds = array<i64: 2, 8, 32>}, {transform_indices = @transform_1, window_bounds = array<i64: 1, 8, 32>}, {transform_indices = @transform_2, window_bounds = array<i64: 1, 32, 96>}, {transform_indices = @transform_3, window_bounds = array<i64: 1, 1, 96>}, {transform_indices = @transform_4, window_bounds = array<i64: 1, 32, 32>}, {transform_indices = @transform_5, window_bounds = array<i64: 1, 32, 128>}, {transform_indices = @transform_6, window_bounds = array<i64: 1, 1, 128>}, {transform_indices = @transform_7, window_bounds = array<i64: 1, 128, 32>}, {transform_indices = @transform_8, window_bounds = array<i64: 2, 8, 32>}, {transform_indices = @transform_9, window_bounds = array<i64: 2, 8, 8>}]} {
    %c0_i32 = arith.constant 0 : i32
    %0 = arith.cmpi eq, %arg1, %c0_i32 : i32
    %1 = arith.extui %0 : i1 to i32
    %c0_i32_0 = arith.constant 0 : i32
    %2 = arith.cmpi ne, %1, %c0_i32_0 : i32
    scf.if %2 {
      %c0_74 = arith.constant 0 : index
      %c0_75 = arith.constant 0 : index
      %c0_76 = arith.constant 0 : index
      %231 = vector.load %arg2[%c0_74, %c0_75, %c0_76] : memref<2x8x32xf32, #tpu.memory_space<vmem>>, vector<2x8x32xf32>
      %c0_77 = arith.constant 0 : index
      %c0_78 = arith.constant 0 : index
      %c0_79 = arith.constant 0 : index
      %232 = vector.load %arg10[%c0_77, %c0_78, %c0_79] : memref<2x8x32xf32, #tpu.memory_space<vmem>>, vector<2x8x32xf32>
      tpu.vector_store %arg10[%c0_77, %c0_78, %c0_79], %231 {strides = array<i32>} : memref<2x8x32xf32, #tpu.memory_space<vmem>>, vector<2x8x32xf32>,
    } else {
    }
    %c0 = arith.constant 0 : index
    %c0_1 = arith.constant 0 : index
    %c0_2 = arith.constant 0 : index
    %3 = vector.load %arg3[%c0, %c0_1, %c0_2] : memref<1x8x32xf32, #tpu.memory_space<vmem>>, vector<1x8x32xf32>
    %4 = vector.shape_cast %3 : vector<1x8x32xf32> to vector<8x32xf32>
    %5 = vector.extract_strided_slice %4 {offsets = [0, 0], sizes = [1, 32], strides = [1, 1]} : vector<8x32xf32> to vector<1x32xf32>
    %6 = vector.extract_strided_slice %4 {offsets = [1, 0], sizes = [1, 32], strides = [1, 1]} : vector<8x32xf32> to vector<1x32xf32>
    %7 = vector.extract_strided_slice %4 {offsets = [2, 0], sizes = [1, 32], strides = [1, 1]} : vector<8x32xf32> to vector<1x32xf32>
    %8 = vector.extract_strided_slice %4 {offsets = [3, 0], sizes = [1, 32], strides = [1, 1]} : vector<8x32xf32> to vector<1x32xf32>
    %9 = vector.extract_strided_slice %4 {offsets = [4, 0], sizes = [1, 32], strides = [1, 1]} : vector<8x32xf32> to vector<1x32xf32>
    %10 = vector.extract_strided_slice %4 {offsets = [5, 0], sizes = [1, 32], strides = [1, 1]} : vector<8x32xf32> to vector<1x32xf32>
    %c0_3 = arith.constant 0 : index
    %c0_4 = arith.constant 0 : index
    %c0_5 = arith.constant 0 : index
    %11 = vector.load %arg4[%c0_3, %c0_4, %c0_5] : memref<1x32x96xbf16, #tpu.memory_space<vmem>>, vector<1x32x96xbf16>
    %12 = vector.shape_cast %11 : vector<1x32x96xbf16> to vector<32x96xbf16>
    %c0_6 = arith.constant 0 : index
    %c0_7 = arith.constant 0 : index
    %c0_8 = arith.constant 0 : index
    %13 = vector.load %arg5[%c0_6, %c0_7, %c0_8] : memref<1x1x96xf32, #tpu.memory_space<vmem>>, vector<1x1x96xf32>
    %14 = vector.shape_cast %13 : vector<1x1x96xf32> to vector<1x96xf32>
    %c0_9 = arith.constant 0 : index
    %c0_10 = arith.constant 0 : index
    %c0_11 = arith.constant 0 : index
    %15 = vector.load %arg6[%c0_9, %c0_10, %c0_11] : memref<1x32x32xbf16, #tpu.memory_space<vmem>>, vector<1x32x32xbf16>
    %16 = vector.shape_cast %15 : vector<1x32x32xbf16> to vector<32x32xbf16>
    %c0_12 = arith.constant 0 : index
    %c0_13 = arith.constant 0 : index
    %c0_14 = arith.constant 0 : index
    %17 = vector.load %arg7[%c0_12, %c0_13, %c0_14] : memref<1x32x128xbf16, #tpu.memory_space<vmem>>, vector<1x32x128xbf16>
    %18 = vector.shape_cast %17 : vector<1x32x128xbf16> to vector<32x128xbf16>
    %c0_15 = arith.constant 0 : index
    %c0_16 = arith.constant 0 : index
    %c0_17 = arith.constant 0 : index
    %19 = vector.load %arg8[%c0_15, %c0_16, %c0_17] : memref<1x1x128xf32, #tpu.memory_space<vmem>>, vector<1x1x128xf32>
    %20 = vector.shape_cast %19 : vector<1x1x128xf32> to vector<1x128xf32>
    %c0_18 = arith.constant 0 : index
    %c0_19 = arith.constant 0 : index
    %c0_20 = arith.constant 0 : index
    %21 = vector.load %arg9[%c0_18, %c0_19, %c0_20] : memref<1x128x32xbf16, #tpu.memory_space<vmem>>, vector<1x128x32xbf16>
    %22 = vector.shape_cast %21 : vector<1x128x32xbf16> to vector<128x32xbf16>
    %c0_21 = arith.constant 0 : index
    %c0_22 = arith.constant 0 : index
    %c0_23 = arith.constant 0 : index
    %23 = vector.load %arg10[%c0_21, %c0_22, %c0_23] : memref<2x8x32xf32, #tpu.memory_space<vmem>>, vector<1x8x32xf32>
    %24 = vector.shape_cast %23 : vector<1x8x32xf32> to vector<8x32xf32>
    %cst = arith.constant dense<0.000000e+00> : vector<8xf32>
    %25 = vector.multi_reduction <add>, %24, %cst [1] : vector<8x32xf32> to vector<8xf32>
    %26 = vector.shape_cast %25 : vector<8xf32> to vector<8x1xf32>
    %cst_24 = arith.constant 3.200000e+01 : f32
    %27 = vector.broadcast %cst_24 : f32 to vector<8x1xf32>
    %28 = arith.divf %26, %27 : vector<8x1xf32>
    %29 = vector.broadcast %28 : vector<8x1xf32> to vector<8x32xf32>
    %30 = arith.subf %24, %29 : vector<8x32xf32>
    %31 = arith.mulf %30, %30 : vector<8x32xf32>
    %cst_25 = arith.constant dense<0.000000e+00> : vector<8xf32>
    %32 = vector.multi_reduction <add>, %31, %cst_25 [1] : vector<8x32xf32> to vector<8xf32>
    %33 = vector.shape_cast %32 : vector<8xf32> to vector<8x1xf32>
    %cst_26 = arith.constant 3.200000e+01 : f32
    %34 = vector.broadcast %cst_26 : f32 to vector<8x1xf32>
    %35 = arith.divf %33, %34 : vector<8x1xf32>
    %36 = vector.broadcast %28 : vector<8x1xf32> to vector<8x32xf32>
    %37 = arith.subf %24, %36 : vector<8x32xf32>
    %cst_27 = arith.constant 9.99999974E-6 : f32
    %38 = vector.broadcast %cst_27 : f32 to vector<8x1xf32>
    %39 = arith.addf %35, %38 : vector<8x1xf32>
    %40 = math.rsqrt %39 : vector<8x1xf32>
    %41 = vector.broadcast %40 : vector<8x1xf32> to vector<8x32xf32>
    %42 = arith.mulf %37, %41 : vector<8x32xf32>
    %43 = vector.broadcast %5 : vector<1x32xf32> to vector<8x32xf32>
    %44 = arith.mulf %42, %43 : vector<8x32xf32>
    %45 = vector.broadcast %6 : vector<1x32xf32> to vector<8x32xf32>
    %46 = arith.addf %44, %45 : vector<8x32xf32>
    %47 = arith.truncf %46 : vector<8x32xf32> to vector<8x32xbf16>
    %cst_28 = arith.constant dense<0.000000e+00> : vector<8x96xf32>
    %48 = tpu.matmul %47, %12, %cst_28 {dimension_numbers = #tpu.dot_dimension_numbers<[1], [0], [0], [1], [0, 0, 1, 1], [], []>} : vector<8x32xbf16>, vector<32x96xbf16>, vector<8x96xf32> -> vector<8x96xf32>
    %49 = vector.broadcast %14 : vector<1x96xf32> to vector<8x96xf32>
    %50 = arith.addf %48, %49 : vector<8x96xf32>
    %51 = vector.extract_strided_slice %50 {offsets = [0, 0], sizes = [8, 32], strides = [1, 1]} : vector<8x96xf32> to vector<8x32xf32>
    %52 = arith.truncf %51 : vector<8x32xf32> to vector<8x32xbf16>
    %53 = vector.shape_cast %52 : vector<8x32xbf16> to vector<8x4x8xbf16>
    %54 = tpu.transpose %53, [1, 0, 2] : vector<8x4x8xbf16> -> vector<4x8x8xbf16>
    %55 = vector.extract_strided_slice %50 {offsets = [0, 32], sizes = [8, 32], strides = [1, 1]} : vector<8x96xf32> to vector<8x32xf32>
    %56 = arith.truncf %55 : vector<8x32xf32> to vector<8x32xbf16>
    %57 = vector.shape_cast %56 : vector<8x32xbf16> to vector<8x4x8xbf16>
    %58 = tpu.transpose %57, [1, 0, 2] : vector<8x4x8xbf16> -> vector<4x8x8xbf16>
    %59 = vector.extract_strided_slice %50 {offsets = [0, 64], sizes = [8, 32], strides = [1, 1]} : vector<8x96xf32> to vector<8x32xf32>
    %60 = arith.truncf %59 : vector<8x32xf32> to vector<8x32xbf16>
    %61 = vector.shape_cast %60 : vector<8x32xbf16> to vector<8x4x8xbf16>
    %62 = tpu.transpose %61, [1, 0, 2] : vector<8x4x8xbf16> -> vector<4x8x8xbf16>
    "tpu.trace_start"() <{level = 10 : i32, message = "hld,hmd->hlm"}> : () -> ()
    %cst_29 = arith.constant dense<0.000000e+00> : vector<4x8x8xf32>
    %63 = tpu.matmul %54, %58, %cst_29 {dimension_numbers = #tpu.dot_dimension_numbers<[2], [2], [1], [1], [0, 0, 0, 1, 1, 1], [0], [0]>} : vector<4x8x8xbf16>, vector<4x8x8xbf16>, vector<4x8x8xf32> -> vector<4x8x8xf32>
    "tpu.trace_stop"() : () -> ()
    %cst_30 = arith.constant dense<0xFF800000> : vector<4x8xf32>
    %64 = vector.multi_reduction <maximumf>, %63, %cst_30 [2] : vector<4x8x8xf32> to vector<4x8xf32>
    %65 = vector.shape_cast %64 : vector<4x8xf32> to vector<4x8x1xf32>
    %66 = vector.broadcast %65 : vector<4x8x1xf32> to vector<4x8x8xf32>
    %67 = arith.subf %63, %66 : vector<4x8x8xf32>
    %68 = math.exp %67 : vector<4x8x8xf32>
    %cst_31 = arith.constant dense<0.000000e+00> : vector<4x8xf32>
    %69 = vector.multi_reduction <add>, %68, %cst_31 [2] : vector<4x8x8xf32> to vector<4x8xf32>
    %70 = vector.shape_cast %69 : vector<4x8xf32> to vector<4x8x1xf32>
    %71 = vector.broadcast %70 : vector<4x8x1xf32> to vector<4x8x8xf32>
    %72 = arith.divf %68, %71 : vector<4x8x8xf32>
    %73 = arith.truncf %72 : vector<4x8x8xf32> to vector<4x8x8xbf16>
    "tpu.trace_start"() <{level = 10 : i32, message = "hlm,hmd->hld"}> : () -> ()
    %cst_32 = arith.constant dense<0.000000e+00> : vector<4x8x8xf32>
    %74 = tpu.matmul %73, %62, %cst_32 {dimension_numbers = #tpu.dot_dimension_numbers<[2], [1], [1], [2], [0, 0, 0, 1, 1, 2], [0], [0]>} : vector<4x8x8xbf16>, vector<4x8x8xbf16>, vector<4x8x8xf32> -> vector<4x8x8xf32>
    "tpu.trace_stop"() : () -> ()
    %75 = tpu.transpose %74, [1, 0, 2] : vector<4x8x8xf32> -> vector<8x4x8xf32>
    %76 = vector.shape_cast %75 : vector<8x4x8xf32> to vector<8x32xf32>
    %77 = arith.truncf %76 : vector<8x32xf32> to vector<8x32xbf16>
    %cst_33 = arith.constant dense<0.000000e+00> : vector<8x32xf32>
    %78 = tpu.matmul %77, %16, %cst_33 {dimension_numbers = #tpu.dot_dimension_numbers<[1], [0], [0], [1], [0, 0, 1, 1], [], []>} : vector<8x32xbf16>, vector<32x32xbf16>, vector<8x32xf32> -> vector<8x32xf32>
    %79 = vector.broadcast %9 : vector<1x32xf32> to vector<8x32xf32>
    %80 = arith.addf %78, %79 : vector<8x32xf32>
    %81 = arith.addf %24, %80 : vector<8x32xf32>
    %c1_i32 = arith.constant 1 : i32
    %82 = arith.cmpi eq, %arg1, %c1_i32 : i32
    %83 = arith.extui %82 : i1 to i32
    %c0_i32_34 = arith.constant 0 : i32
    %84 = arith.cmpi ne, %83, %c0_i32_34 : i32
    scf.if %84 {
      %cst_74 = arith.constant dense<0.000000e+00> : vector<8x8xf32>
      %231 = vector.multi_reduction <add>, %72, %cst_74 [0] : vector<4x8x8xf32> to vector<8x8xf32>
      %cst_75 = arith.constant 4.000000e+00 : f32
      %232 = vector.broadcast %cst_75 : f32 to vector<8x8xf32>
      %233 = arith.divf %231, %232 : vector<8x8xf32>
      %c0_76 = arith.constant 0 : index
      %c0_77 = arith.constant 0 : index
      %c0_78 = arith.constant 0 : index
      %234 = vector.load %arg11[%c0_76, %c0_77, %c0_78] : memref<2x8x8xf32, #tpu.memory_space<vmem>>, vector<1x8x8xf32>
      %235 = vector.shape_cast %234 : vector<1x8x8xf32> to vector<8x8xf32>
      %236 = vector.shape_cast %233 : vector<8x8xf32> to vector<1x8x8xf32>
      tpu.vector_store %arg11[%c0_76, %c0_77, %c0_78], %236 {strides = array<i32>} : memref<2x8x8xf32, #tpu.memory_space<vmem>>, vector<1x8x8xf32>,
    } else {
    }
    %cst_35 = arith.constant dense<0.000000e+00> : vector<8xf32>
    %85 = vector.multi_reduction <add>, %81, %cst_35 [1] : vector<8x32xf32> to vector<8xf32>
    %86 = vector.shape_cast %85 : vector<8xf32> to vector<8x1xf32>
    %cst_36 = arith.constant 3.200000e+01 : f32
    %87 = vector.broadcast %cst_36 : f32 to vector<8x1xf32>
    %88 = arith.divf %86, %87 : vector<8x1xf32>
    %89 = vector.broadcast %88 : vector<8x1xf32> to vector<8x32xf32>
    %90 = arith.subf %81, %89 : vector<8x32xf32>
    %91 = arith.mulf %90, %90 : vector<8x32xf32>
    %cst_37 = arith.constant dense<0.000000e+00> : vector<8xf32>
    %92 = vector.multi_reduction <add>, %91, %cst_37 [1] : vector<8x32xf32> to vector<8xf32>
    %93 = vector.shape_cast %92 : vector<8xf32> to vector<8x1xf32>
    %cst_38 = arith.constant 3.200000e+01 : f32
    %94 = vector.broadcast %cst_38 : f32 to vector<8x1xf32>
    %95 = arith.divf %93, %94 : vector<8x1xf32>
    %96 = vector.broadcast %88 : vector<8x1xf32> to vector<8x32xf32>
    %97 = arith.subf %81, %96 : vector<8x32xf32>
    %cst_39 = arith.constant 9.99999974E-6 : f32
    %98 = vector.broadcast %cst_39 : f32 to vector<8x1xf32>
    %99 = arith.addf %95, %98 : vector<8x1xf32>
    %100 = math.rsqrt %99 : vector<8x1xf32>
    %101 = vector.broadcast %100 : vector<8x1xf32> to vector<8x32xf32>
    %102 = arith.mulf %97, %101 : vector<8x32xf32>
    %103 = vector.broadcast %7 : vector<1x32xf32> to vector<8x32xf32>
    %104 = arith.mulf %102, %103 : vector<8x32xf32>
    %105 = vector.broadcast %8 : vector<1x32xf32> to vector<8x32xf32>
    %106 = arith.addf %104, %105 : vector<8x32xf32>
    %107 = arith.truncf %106 : vector<8x32xf32> to vector<8x32xbf16>
    %cst_40 = arith.constant dense<0.000000e+00> : vector<8x128xf32>
    %108 = tpu.matmul %107, %18, %cst_40 {dimension_numbers = #tpu.dot_dimension_numbers<[1], [0], [0], [1], [0, 0, 1, 1], [], []>} : vector<8x32xbf16>, vector<32x128xbf16>, vector<8x128xf32> -> vector<8x128xf32>
    %109 = vector.broadcast %20 : vector<1x128xf32> to vector<8x128xf32>
    %110 = arith.addf %108, %109 : vector<8x128xf32>
    %cst_41 = arith.constant 1.702000e+00 : f32
    %111 = vector.broadcast %cst_41 : f32 to vector<8x128xf32>
    %112 = arith.mulf %111, %110 : vector<8x128xf32>
    %113 = arith.negf %112 : vector<8x128xf32>
    %114 = math.exp %113 : vector<8x128xf32>
    %cst_42 = arith.constant 1.000000e+00 : f32
    %115 = vector.broadcast %cst_42 : f32 to vector<8x128xf32>
    %116 = arith.addf %115, %114 : vector<8x128xf32>
    %117 = arith.divf %115, %116 : vector<8x128xf32>
    %118 = arith.mulf %110, %117 : vector<8x128xf32>
    %119 = arith.truncf %118 : vector<8x128xf32> to vector<8x128xbf16>
    %cst_43 = arith.constant dense<0.000000e+00> : vector<8x32xf32>
    %120 = tpu.matmul %119, %22, %cst_43 {dimension_numbers = #tpu.dot_dimension_numbers<[1], [0], [0], [1], [0, 0, 1, 1], [], []>} : vector<8x128xbf16>, vector<128x32xbf16>, vector<8x32xf32> -> vector<8x32xf32>
    %121 = vector.broadcast %10 : vector<1x32xf32> to vector<8x32xf32>
    %122 = arith.addf %120, %121 : vector<8x32xf32>
    %123 = arith.addf %81, %122 : vector<8x32xf32>
    %c0_44 = arith.constant 0 : index
    %c0_45 = arith.constant 0 : index
    %c0_46 = arith.constant 0 : index
    %124 = vector.load %arg10[%c0_44, %c0_45, %c0_46] : memref<2x8x32xf32, #tpu.memory_space<vmem>>, vector<1x8x32xf32>
    %125 = vector.shape_cast %124 : vector<1x8x32xf32> to vector<8x32xf32>
    %126 = vector.shape_cast %123 : vector<8x32xf32> to vector<1x8x32xf32>
    tpu.vector_store %arg10[%c0_44, %c0_45, %c0_46], %126 {strides = array<i32>} : memref<2x8x32xf32, #tpu.memory_space<vmem>>, vector<1x8x32xf32>,
    %c1 = arith.constant 1 : index
    %c0_47 = arith.constant 0 : index
    %c0_48 = arith.constant 0 : index
    %127 = vector.load %arg10[%c1, %c0_47, %c0_48] : memref<2x8x32xf32, #tpu.memory_space<vmem>>, vector<1x8x32xf32>
    %128 = vector.shape_cast %127 : vector<1x8x32xf32> to vector<8x32xf32>
    %cst_49 = arith.constant dense<0.000000e+00> : vector<8xf32>
    %129 = vector.multi_reduction <add>, %128, %cst_49 [1] : vector<8x32xf32> to vector<8xf32>
    %130 = vector.shape_cast %129 : vector<8xf32> to vector<8x1xf32>
    %cst_50 = arith.constant 3.200000e+01 : f32
    %131 = vector.broadcast %cst_50 : f32 to vector<8x1xf32>
    %132 = arith.divf %130, %131 : vector<8x1xf32>
    %133 = vector.broadcast %132 : vector<8x1xf32> to vector<8x32xf32>
    %134 = arith.subf %128, %133 : vector<8x32xf32>
    %135 = arith.mulf %134, %134 : vector<8x32xf32>
    %cst_51 = arith.constant dense<0.000000e+00> : vector<8xf32>
    %136 = vector.multi_reduction <add>, %135, %cst_51 [1] : vector<8x32xf32> to vector<8xf32>
    %137 = vector.shape_cast %136 : vector<8xf32> to vector<8x1xf32>
    %cst_52 = arith.constant 3.200000e+01 : f32
    %138 = vector.broadcast %cst_52 : f32 to vector<8x1xf32>
    %139 = arith.divf %137, %138 : vector<8x1xf32>
    %140 = vector.broadcast %132 : vector<8x1xf32> to vector<8x32xf32>
    %141 = arith.subf %128, %140 : vector<8x32xf32>
    %cst_53 = arith.constant 9.99999974E-6 : f32
    %142 = vector.broadcast %cst_53 : f32 to vector<8x1xf32>
    %143 = arith.addf %139, %142 : vector<8x1xf32>
    %144 = math.rsqrt %143 : vector<8x1xf32>
    %145 = vector.broadcast %144 : vector<8x1xf32> to vector<8x32xf32>
    %146 = arith.mulf %141, %145 : vector<8x32xf32>
    %147 = vector.broadcast %5 : vector<1x32xf32> to vector<8x32xf32>
    %148 = arith.mulf %146, %147 : vector<8x32xf32>
    %149 = vector.broadcast %6 : vector<1x32xf32> to vector<8x32xf32>
    %150 = arith.addf %148, %149 : vector<8x32xf32>
    %151 = arith.truncf %150 : vector<8x32xf32> to vector<8x32xbf16>
    %cst_54 = arith.constant dense<0.000000e+00> : vector<8x96xf32>
    %152 = tpu.matmul %151, %12, %cst_54 {dimension_numbers = #tpu.dot_dimension_numbers<[1], [0], [0], [1], [0, 0, 1, 1], [], []>} : vector<8x32xbf16>, vector<32x96xbf16>, vector<8x96xf32> -> vector<8x96xf32>
    %153 = vector.broadcast %14 : vector<1x96xf32> to vector<8x96xf32>
    %154 = arith.addf %152, %153 : vector<8x96xf32>
    %155 = vector.extract_strided_slice %154 {offsets = [0, 0], sizes = [8, 32], strides = [1, 1]} : vector<8x96xf32> to vector<8x32xf32>
    %156 = arith.truncf %155 : vector<8x32xf32> to vector<8x32xbf16>
    %157 = vector.shape_cast %156 : vector<8x32xbf16> to vector<8x4x8xbf16>
    %158 = tpu.transpose %157, [1, 0, 2] : vector<8x4x8xbf16> -> vector<4x8x8xbf16>
    %159 = vector.extract_strided_slice %154 {offsets = [0, 32], sizes = [8, 32], strides = [1, 1]} : vector<8x96xf32> to vector<8x32xf32>
    %160 = arith.truncf %159 : vector<8x32xf32> to vector<8x32xbf16>
    %161 = vector.shape_cast %160 : vector<8x32xbf16> to vector<8x4x8xbf16>
    %162 = tpu.transpose %161, [1, 0, 2] : vector<8x4x8xbf16> -> vector<4x8x8xbf16>
    %163 = vector.extract_strided_slice %154 {offsets = [0, 64], sizes = [8, 32], strides = [1, 1]} : vector<8x96xf32> to vector<8x32xf32>
    %164 = arith.truncf %163 : vector<8x32xf32> to vector<8x32xbf16>
    %165 = vector.shape_cast %164 : vector<8x32xbf16> to vector<8x4x8xbf16>
    %166 = tpu.transpose %165, [1, 0, 2] : vector<8x4x8xbf16> -> vector<4x8x8xbf16>
    "tpu.trace_start"() <{level = 10 : i32, message = "hld,hmd->hlm"}> : () -> ()
    %cst_55 = arith.constant dense<0.000000e+00> : vector<4x8x8xf32>
    %167 = tpu.matmul %158, %162, %cst_55 {dimension_numbers = #tpu.dot_dimension_numbers<[2], [2], [1], [1], [0, 0, 0, 1, 1, 1], [0], [0]>} : vector<4x8x8xbf16>, vector<4x8x8xbf16>, vector<4x8x8xf32> -> vector<4x8x8xf32>
    "tpu.trace_stop"() : () -> ()
    %cst_56 = arith.constant dense<0xFF800000> : vector<4x8xf32>
    %168 = vector.multi_reduction <maximumf>, %167, %cst_56 [2] : vector<4x8x8xf32> to vector<4x8xf32>
    %169 = vector.shape_cast %168 : vector<4x8xf32> to vector<4x8x1xf32>
    %170 = vector.broadcast %169 : vector<4x8x1xf32> to vector<4x8x8xf32>
    %171 = arith.subf %167, %170 : vector<4x8x8xf32>
    %172 = math.exp %171 : vector<4x8x8xf32>
    %cst_57 = arith.constant dense<0.000000e+00> : vector<4x8xf32>
    %173 = vector.multi_reduction <add>, %172, %cst_57 [2] : vector<4x8x8xf32> to vector<4x8xf32>
    %174 = vector.shape_cast %173 : vector<4x8xf32> to vector<4x8x1xf32>
    %175 = vector.broadcast %174 : vector<4x8x1xf32> to vector<4x8x8xf32>
    %176 = arith.divf %172, %175 : vector<4x8x8xf32>
    %177 = arith.truncf %176 : vector<4x8x8xf32> to vector<4x8x8xbf16>
    "tpu.trace_start"() <{level = 10 : i32, message = "hlm,hmd->hld"}> : () -> ()
    %cst_58 = arith.constant dense<0.000000e+00> : vector<4x8x8xf32>
    %178 = tpu.matmul %177, %166, %cst_58 {dimension_numbers = #tpu.dot_dimension_numbers<[2], [1], [1], [2], [0, 0, 0, 1, 1, 2], [0], [0]>} : vector<4x8x8xbf16>, vector<4x8x8xbf16>, vector<4x8x8xf32> -> vector<4x8x8xf32>
    "tpu.trace_stop"() : () -> ()
    %179 = tpu.transpose %178, [1, 0, 2] : vector<4x8x8xf32> -> vector<8x4x8xf32>
    %180 = vector.shape_cast %179 : vector<8x4x8xf32> to vector<8x32xf32>
    %181 = arith.truncf %180 : vector<8x32xf32> to vector<8x32xbf16>
    %cst_59 = arith.constant dense<0.000000e+00> : vector<8x32xf32>
    %182 = tpu.matmul %181, %16, %cst_59 {dimension_numbers = #tpu.dot_dimension_numbers<[1], [0], [0], [1], [0, 0, 1, 1], [], []>} : vector<8x32xbf16>, vector<32x32xbf16>, vector<8x32xf32> -> vector<8x32xf32>
    %183 = vector.broadcast %9 : vector<1x32xf32> to vector<8x32xf32>
    %184 = arith.addf %182, %183 : vector<8x32xf32>
    %185 = arith.addf %128, %184 : vector<8x32xf32>
    %c1_i32_60 = arith.constant 1 : i32
    %186 = arith.cmpi eq, %arg1, %c1_i32_60 : i32
    %187 = arith.extui %186 : i1 to i32
    %c0_i32_61 = arith.constant 0 : i32
    %188 = arith.cmpi ne, %187, %c0_i32_61 : i32
    scf.if %188 {
      %cst_74 = arith.constant dense<0.000000e+00> : vector<8x8xf32>
      %231 = vector.multi_reduction <add>, %176, %cst_74 [0] : vector<4x8x8xf32> to vector<8x8xf32>
      %cst_75 = arith.constant 4.000000e+00 : f32
      %232 = vector.broadcast %cst_75 : f32 to vector<8x8xf32>
      %233 = arith.divf %231, %232 : vector<8x8xf32>
      %c1_76 = arith.constant 1 : index
      %c0_77 = arith.constant 0 : index
      %c0_78 = arith.constant 0 : index
      %234 = vector.load %arg11[%c1_76, %c0_77, %c0_78] : memref<2x8x8xf32, #tpu.memory_space<vmem>>, vector<1x8x8xf32>
      %235 = vector.shape_cast %234 : vector<1x8x8xf32> to vector<8x8xf32>
      %236 = vector.shape_cast %233 : vector<8x8xf32> to vector<1x8x8xf32>
      tpu.vector_store %arg11[%c1_76, %c0_77, %c0_78], %236 {strides = array<i32>} : memref<2x8x8xf32, #tpu.memory_space<vmem>>, vector<1x8x8xf32>,
    } else {
    }
    %cst_62 = arith.constant dense<0.000000e+00> : vector<8xf32>
    %189 = vector.multi_reduction <add>, %185, %cst_62 [1] : vector<8x32xf32> to vector<8xf32>
    %190 = vector.shape_cast %189 : vector<8xf32> to vector<8x1xf32>
    %cst_63 = arith.constant 3.200000e+01 : f32
    %191 = vector.broadcast %cst_63 : f32 to vector<8x1xf32>
    %192 = arith.divf %190, %191 : vector<8x1xf32>
    %193 = vector.broadcast %192 : vector<8x1xf32> to vector<8x32xf32>
    %194 = arith.subf %185, %193 : vector<8x32xf32>
    %195 = arith.mulf %194, %194 : vector<8x32xf32>
    %cst_64 = arith.constant dense<0.000000e+00> : vector<8xf32>
    %196 = vector.multi_reduction <add>, %195, %cst_64 [1] : vector<8x32xf32> to vector<8xf32>
    %197 = vector.shape_cast %196 : vector<8xf32> to vector<8x1xf32>
    %cst_65 = arith.constant 3.200000e+01 : f32
    %198 = vector.broadcast %cst_65 : f32 to vector<8x1xf32>
    %199 = arith.divf %197, %198 : vector<8x1xf32>
    %200 = vector.broadcast %192 : vector<8x1xf32> to vector<8x32xf32>
    %201 = arith.subf %185, %200 : vector<8x32xf32>
    %cst_66 = arith.constant 9.99999974E-6 : f32
    %202 = vector.broadcast %cst_66 : f32 to vector<8x1xf32>
    %203 = arith.addf %199, %202 : vector<8x1xf32>
    %204 = math.rsqrt %203 : vector<8x1xf32>
    %205 = vector.broadcast %204 : vector<8x1xf32> to vector<8x32xf32>
    %206 = arith.mulf %201, %205 : vector<8x32xf32>
    %207 = vector.broadcast %7 : vector<1x32xf32> to vector<8x32xf32>
    %208 = arith.mulf %206, %207 : vector<8x32xf32>
    %209 = vector.broadcast %8 : vector<1x32xf32> to vector<8x32xf32>
    %210 = arith.addf %208, %209 : vector<8x32xf32>
    %211 = arith.truncf %210 : vector<8x32xf32> to vector<8x32xbf16>
    %cst_67 = arith.constant dense<0.000000e+00> : vector<8x128xf32>
    %212 = tpu.matmul %211, %18, %cst_67 {dimension_numbers = #tpu.dot_dimension_numbers<[1], [0], [0], [1], [0, 0, 1, 1], [], []>} : vector<8x32xbf16>, vector<32x128xbf16>, vector<8x128xf32> -> vector<8x128xf32>
    %213 = vector.broadcast %20 : vector<1x128xf32> to vector<8x128xf32>
    %214 = arith.addf %212, %213 : vector<8x128xf32>
    %cst_68 = arith.constant 1.702000e+00 : f32
    %215 = vector.broadcast %cst_68 : f32 to vector<8x128xf32>
    %216 = arith.mulf %215, %214 : vector<8x128xf32>
    %217 = arith.negf %216 : vector<8x128xf32>
    %218 = math.exp %217 : vector<8x128xf32>
    %cst_69 = arith.constant 1.000000e+00 : f32
    %219 = vector.broadcast %cst_69 : f32 to vector<8x128xf32>
    %220 = arith.addf %219, %218 : vector<8x128xf32>
    %221 = arith.divf %219, %220 : vector<8x128xf32>
    %222 = arith.mulf %214, %221 : vector<8x128xf32>
    %223 = arith.truncf %222 : vector<8x128xf32> to vector<8x128xbf16>
    %cst_70 = arith.constant dense<0.000000e+00> : vector<8x32xf32>
    %224 = tpu.matmul %223, %22, %cst_70 {dimension_numbers = #tpu.dot_dimension_numbers<[1], [0], [0], [1], [0, 0, 1, 1], [], []>} : vector<8x128xbf16>, vector<128x32xbf16>, vector<8x32xf32> -> vector<8x32xf32>
    %225 = vector.broadcast %10 : vector<1x32xf32> to vector<8x32xf32>
    %226 = arith.addf %224, %225 : vector<8x32xf32>
    %227 = arith.addf %185, %226 : vector<8x32xf32>
    %c1_71 = arith.constant 1 : index
    %c0_72 = arith.constant 0 : index
    %c0_73 = arith.constant 0 : index
    %228 = vector.load %arg10[%c1_71, %c0_72, %c0_73] : memref<2x8x32xf32, #tpu.memory_space<vmem>>, vector<1x8x32xf32>
    %229 = vector.shape_cast %228 : vector<1x8x32xf32> to vector<8x32xf32>
    %230 = vector.shape_cast %227 : vector<8x32xf32> to vector<1x8x32xf32>
    tpu.vector_store %arg10[%c1_71, %c0_72, %c0_73], %230 {strides = array<i32>} : memref<2x8x32xf32, #tpu.memory_space<vmem>>, vector<1x8x32xf32>,
    return
  }
  func.func @transform_0(%arg0: i32, %arg1: i32) -> (i32, i32, i32) {
    %c0_i32 = arith.constant 0 : i32
    %c0_i32_0 = arith.constant 0 : i32
    %c0_i32_1 = arith.constant 0 : i32
    return %arg0, %c0_i32, %c0_i32_0 : i32, i32, i32
  }
  func.func @transform_1(%arg0: i32, %arg1: i32) -> (i32, i32, i32) {
    %c0_i32 = arith.constant 0 : i32
    %c0_i32_0 = arith.constant 0 : i32
    %c0_i32_1 = arith.constant 0 : i32
    return %arg1, %c0_i32, %c0_i32_0 : i32, i32, i32
  }
  func.func @transform_2(%arg0: i32, %arg1: i32) -> (i32, i32, i32) {
    %c0_i32 = arith.constant 0 : i32
    %c0_i32_0 = arith.constant 0 : i32
    %c0_i32_1 = arith.constant 0 : i32
    return %arg1, %c0_i32, %c0_i32_0 : i32, i32, i32
  }
  func.func @transform_3(%arg0: i32, %arg1: i32) -> (i32, i32, i32) {
    %c0_i32 = arith.constant 0 : i32
    %c0_i32_0 = arith.constant 0 : i32
    %c0_i32_1 = arith.constant 0 : i32
    return %arg1, %c0_i32, %c0_i32_0 : i32, i32, i32
  }
  func.func @transform_4(%arg0: i32, %arg1: i32) -> (i32, i32, i32) {
    %c0_i32 = arith.constant 0 : i32
    %c0_i32_0 = arith.constant 0 : i32
    %c0_i32_1 = arith.constant 0 : i32
    return %arg1, %c0_i32, %c0_i32_0 : i32, i32, i32
  }
  func.func @transform_5(%arg0: i32, %arg1: i32) -> (i32, i32, i32) {
    %c0_i32 = arith.constant 0 : i32
    %c0_i32_0 = arith.constant 0 : i32
    %c0_i32_1 = arith.constant 0 : i32
    return %arg1, %c0_i32, %c0_i32_0 : i32, i32, i32
  }
  func.func @transform_6(%arg0: i32, %arg1: i32) -> (i32, i32, i32) {
    %c0_i32 = arith.constant 0 : i32
    %c0_i32_0 = arith.constant 0 : i32
    %c0_i32_1 = arith.constant 0 : i32
    return %arg1, %c0_i32, %c0_i32_0 : i32, i32, i32
  }
  func.func @transform_7(%arg0: i32, %arg1: i32) -> (i32, i32, i32) {
    %c0_i32 = arith.constant 0 : i32
    %c0_i32_0 = arith.constant 0 : i32
    %c0_i32_1 = arith.constant 0 : i32
    return %arg1, %c0_i32, %c0_i32_0 : i32, i32, i32
  }
  func.func @transform_8(%arg0: i32, %arg1: i32) -> (i32, i32, i32) {
    %c0_i32 = arith.constant 0 : i32
    %c0_i32_0 = arith.constant 0 : i32
    %c0_i32_1 = arith.constant 0 : i32
    return %arg0, %c0_i32, %c0_i32_0 : i32, i32, i32
  }
  func.func @transform_9(%arg0: i32, %arg1: i32) -> (i32, i32, i32) {
    %c0_i32 = arith.constant 0 : i32
    %c0_i32_0 = arith.constant 0 : i32
    %c0_i32_1 = arith.constant 0 : i32
    return %arg0, %c0_i32, %c0_i32_0 : i32, i32, i32
  }
}

</mosaic_0001>

<llo_original>
// kernel: tpu_custom_call.1
$region0: #{tpu_custom_call.1}
  #allocation0 [shape = 'u32[]', space=smem, size = 0x4, offset = 0x4, fixed_abs, tag = 'smem constant byte address 0x4 - core index']
  #allocation1 [shape = 'u32[72,128]{1,0:T(1,128)}', space=vmem, size = 0x9000, scoped, tag = 'internal scratch']
  %s0 = inlined_call_operand.vmem [shape: f32[2,8,32], index: 0, kind: input, shape index: {}]
  %s1 = inlined_call_operand.vmem [shape: f32[2,8,32], index: 1, kind: input, shape index: {}]
  %s2 = inlined_call_operand.vmem [shape: bf16[2,32,96], index: 2, kind: input, shape index: {}]
  %s3 = inlined_call_operand.vmem [shape: f32[2,1,96], index: 3, kind: input, shape index: {}]
  %s4 = inlined_call_operand.vmem [shape: bf16[2,32,32], index: 4, kind: input, shape index: {}]
  %s5 = inlined_call_operand.vmem [shape: bf16[2,32,128], index: 5, kind: input, shape index: {}]
  %s6 = inlined_call_operand.vmem [shape: f32[2,1,128], index: 6, kind: input, shape index: {}]
  %s7 = inlined_call_operand.vmem [shape: bf16[2,128,32], index: 7, kind: input, shape index: {}]
  %s8 = inlined_call_operand.hbm [shape: f32[2,8,32], index: 8, kind: output, shape index: {0}]
  %s9 = inlined_call_operand.hbm [shape: f32[2,8,8], index: 9, kind: output, shape index: {1}]
  %10 = xla_tuple %s8, %s9
  %s11 = sld [smem:[#allocation0]]
  $region85: #{tpu_custom_call.1} parent=0
    _
  %s13 = ssub.s32 1, %s11
  %s14 = scalar_select 0, %s13, %s11
  $region1: #{tpu_custom_call.1} parent=0
    #allocation2 [shape = 'u8[8192]{0}', space=vmem, size = 0x2000, scoped, tag = 'output window, operand 0, single buffered']
    #allocation3 [shape = 's32[2]{0}', space=sflag, size = 0x8, scoped, tag = 'scoped memory for tpu_custom_call.1']
    #allocation4 [shape = 'u8[8192]{0}', space=vmem, size = 0x2000, scoped, tag = 'output window, operand 1, single buffered']
    #allocation5 [shape = 's32[1]{0}', space=sflag, size = 0x4, scoped, tag = 'scoped memory for tpu_custom_call.1']
    %15 = vsyncpa [#allocation3], 0
    %16 = vsyncpa [#allocation5], 0
    loop: start=0, step=1, limit=4
    $region2: #{tpu_custom_call.1} parent=1 // loop_pre_header
      _
    $region3: #{tpu_custom_call.1} parent=1 // loop_header
      %s18 = sphi 0, %s22
      %p19 = scmp.ge.s32.totalorder %s18, 4
      %s25 = sphi 0, %s37
      %s26 = sphi 0, %s33
      %s27 = sphi 0, %s25
      %s28 = sphi 0, %s26
      %s29 = sphi 0, %s27
      %s30 = sphi 0, %s28
      %s40 = sphi 0, %s42
      %s43 = sphi 0, %s40
      %s44 = sphi 0, %s43
      %s60 = sphi 0, %s44
      %s66 = sphi 0, %s68
      %s69 = sphi 0, %s66
      %s70 = sphi 0, %s69
      %s86 = sphi 0, %s70
      %s92 = sphi 0, %s94
      %s95 = sphi 0, %s92
      %s96 = sphi 0, %s95
      %s112 = sphi 0, %s96
      %s118 = sphi 0, %s120
      %s121 = sphi 0, %s118
      %s122 = sphi 0, %s121
      %s138 = sphi 0, %s122
      %s144 = sphi 0, %s146
      %s147 = sphi 0, %s144
      %s148 = sphi 0, %s147
      %s164 = sphi 0, %s148
      %s170 = sphi 0, %s172
      %s173 = sphi 0, %s170
      %s174 = sphi 0, %s173
      %s190 = sphi 0, %s174
      %s196 = sphi 0, %s198
      %s199 = sphi 0, %s196
      %s200 = sphi 0, %s199
      %s216 = sphi 0, %s200
      %s222 = sphi 0, %s224
      %s225 = sphi 0, %s222
      %s226 = sphi 0, %s225
      %s242 = sphi 0, %s226
      %s248 = sphi 0, %s250
      %s251 = sphi 0, %s248
      %s252 = sphi 0, %s251
      %s268 = sphi 0, %s252
      %s274 = sphi 0, %s276
      %s277 = sphi 0, %s274
      %s278 = sphi 0, %s277
      %s294 = sphi 0, %s278
    $region4: #{tpu_custom_call.1} parent=1 // loop_header_branch
      %21 = sbr.rel (%p19) target = $region8
    $region5: #{tpu_custom_call.1} parent=1 // loop_body
      %s23 = ssub.s32 %s18, 1
      %s24 = ssub.s32 %s18, 2
      %s31 = sadd.s32 1, %s26
      %p32 = scmp.ge.s32.totalorder %s31, 2
      %s33 = scalar_select %p32, 0, %s31
      %s34 = sadd.s32 1, %s25
      %s35 = scalar_select %p32, %s34, %s25
      %p36 = scmp.ge.s32.totalorder %s35, 1
      %s37 = scalar_select %p36, 0, %s35
      %s38 = ssub.s32 %s25, %s37
      %p39 = scmp.eq.s32.totalorder %s38, 0
      %s41 = sadd.s32 %s40, 1
      %s42 = scalar_select %p39, %s40, %s41
      %p45 = pneg %p39
      %p46 = scmp.eq.s32.totalorder %s18, 1
      %p47 = por %p45, %p46
      %p48 = scmp.ne.s32.totalorder %s40, %s43
      %p49 = scmp.eq.s32.totalorder %s18, 0
      %p50 = por %p48, %p49
      %p51 = scmp.ne.s32.totalorder %s40, %s43
      %p52 = scmp.eq.s32.totalorder %s23, 1
      %p53 = por %p51, %p52
      %p54 = scmp.ne.s32.totalorder %s43, %s44
      %p55 = scmp.eq.s32.totalorder %s23, 0
      %p56 = por %p54, %p55
      %p57 = scmp.ne.s32.totalorder %s43, %s44
      %p58 = scmp.eq.s32.totalorder %s24, 1
      %p59 = por %p57, %p58
      %p61 = scmp.ne.s32.totalorder %s44, %s60
      %p62 = scmp.eq.s32.totalorder %s24, 0
      %p63 = por %p61, %p62
      %s64 = ssub.s32 %s26, %s33
      %p65 = scmp.eq.s32.totalorder %s64, 0
      %s67 = sadd.s32 %s66, 1
      %s68 = scalar_select %p65, %s66, %s67
      %p71 = pneg %p65
      %p72 = scmp.eq.s32.totalorder %s18, 1
      %p73 = por %p71, %p72
      %p74 = scmp.ne.s32.totalorder %s66, %s69
      %p75 = scmp.eq.s32.totalorder %s18, 0
      %p76 = por %p74, %p75
      %p77 = scmp.ne.s32.totalorder %s66, %s69
      %p78 = scmp.eq.s32.totalorder %s23, 1
      %p79 = por %p77, %p78
      %p80 = scmp.ne.s32.totalorder %s69, %s70
      %p81 = scmp.eq.s32.totalorder %s23, 0
      %p82 = por %p80, %p81
      %p83 = scmp.ne.s32.totalorder %s69, %s70
      %p84 = scmp.eq.s32.totalorder %s24, 1
      %p85 = por %p83, %p84
      %p87 = scmp.ne.s32.totalorder %s70, %s86
      %p88 = scmp.eq.s32.totalorder %s24, 0
      %p89 = por %p87, %p88
      %s90 = ssub.s32 %s26, %s33
      %p91 = scmp.eq.s32.totalorder %s90, 0
      %s93 = sadd.s32 %s92, 1
      %s94 = scalar_select %p91, %s92, %s93
      %p97 = pneg %p91
      %p98 = scmp.eq.s32.totalorder %s18, 1
      %p99 = por %p97, %p98
      %p100 = scmp.ne.s32.totalorder %s92, %s95
      %p101 = scmp.eq.s32.totalorder %s18, 0
      %p102 = por %p100, %p101
      %p103 = scmp.ne.s32.totalorder %s92, %s95
      %p104 = scmp.eq.s32.totalorder %s23, 1
      %p105 = por %p103, %p104
      %p106 = scmp.ne.s32.totalorder %s95, %s96
      %p107 = scmp.eq.s32.totalorder %s23, 0
      %p108 = por %p106, %p107
      %p109 = scmp.ne.s32.totalorder %s95, %s96
      %p110 = scmp.eq.s32.totalorder %s24, 1
      %p111 = por %p109, %p110
      %p113 = scmp.ne.s32.totalorder %s96, %s112
      %p114 = scmp.eq.s32.totalorder %s24, 0
      %p115 = por %p113, %p114
      %s116 = ssub.s32 %s26, %s33
      %p117 = scmp.eq.s32.totalorder %s116, 0
      %s119 = sadd.s32 %s118, 1
      %s120 = scalar_select %p117, %s118, %s119
      %p123 = pneg %p117
      %p124 = scmp.eq.s32.totalorder %s18, 1
      %p125 = por %p123, %p124
      %p126 = scmp.ne.s32.totalorder %s118, %s121
      %p127 = scmp.eq.s32.totalorder %s18, 0
      %p128 = por %p126, %p127
      %p129 = scmp.ne.s32.totalorder %s118, %s121
      %p130 = scmp.eq.s32.totalorder %s23, 1
      %p131 = por %p129, %p130
      %p132 = scmp.ne.s32.totalorder %s121, %s122
      %p133 = scmp.eq.s32.totalorder %s23, 0
      %p134 = por %p132, %p133
      %p135 = scmp.ne.s32.totalorder %s121, %s122
      %p136 = scmp.eq.s32.totalorder %s24, 1
      %p137 = por %p135, %p136
      %p139 = scmp.ne.s32.totalorder %s122, %s138
      %p140 = scmp.eq.s32.totalorder %s24, 0
      %p141 = por %p139, %p140
      %s142 = ssub.s32 %s26, %s33
      %p143 = scmp.eq.s32.totalorder %s142, 0
      %s145 = sadd.s32 %s144, 1
      %s146 = scalar_select %p143, %s144, %s145
      %p149 = pneg %p143
      %p150 = scmp.eq.s32.totalorder %s18, 1
      %p151 = por %p149, %p150
      %p152 = scmp.ne.s32.totalorder %s144, %s147
      %p153 = scmp.eq.s32.totalorder %s18, 0
      %p154 = por %p152, %p153
      %p155 = scmp.ne.s32.totalorder %s144, %s147
      %p156 = scmp.eq.s32.totalorder %s23, 1
      %p157 = por %p155, %p156
      %p158 = scmp.ne.s32.totalorder %s147, %s148
      %p159 = scmp.eq.s32.totalorder %s23, 0
      %p160 = por %p158, %p159
      %p161 = scmp.ne.s32.totalorder %s147, %s148
      %p162 = scmp.eq.s32.totalorder %s24, 1
      %p163 = por %p161, %p162
      %p165 = scmp.ne.s32.totalorder %s148, %s164
      %p166 = scmp.eq.s32.totalorder %s24, 0
      %p167 = por %p165, %p166
      %s168 = ssub.s32 %s26, %s33
      %p169 = scmp.eq.s32.totalorder %s168, 0
      %s171 = sadd.s32 %s170, 1
      %s172 = scalar_select %p169, %s170, %s171
      %p175 = pneg %p169
      %p176 = scmp.eq.s32.totalorder %s18, 1
      %p177 = por %p175, %p176
      %p178 = scmp.ne.s32.totalorder %s170, %s173
      %p179 = scmp.eq.s32.totalorder %s18, 0
      %p180 = por %p178, %p179
      %p181 = scmp.ne.s32.totalorder %s170, %s173
      %p182 = scmp.eq.s32.totalorder %s23, 1
      %p183 = por %p181, %p182
      %p184 = scmp.ne.s32.totalorder %s173, %s174
      %p185 = scmp.eq.s32.totalorder %s23, 0
      %p186 = por %p184, %p185
      %p187 = scmp.ne.s32.totalorder %s173, %s174
      %p188 = scmp.eq.s32.totalorder %s24, 1
      %p189 = por %p187, %p188
      %p191 = scmp.ne.s32.totalorder %s174, %s190
      %p192 = scmp.eq.s32.totalorder %s24, 0
      %p193 = por %p191, %p192
      %s194 = ssub.s32 %s26, %s33
      %p195 = scmp.eq.s32.totalorder %s194, 0
      %s197 = sadd.s32 %s196, 1
      %s198 = scalar_select %p195, %s196, %s197
      %p201 = pneg %p195
      %p202 = scmp.eq.s32.totalorder %s18, 1
      %p203 = por %p201, %p202
      %p204 = scmp.ne.s32.totalorder %s196, %s199
      %p205 = scmp.eq.s32.totalorder %s18, 0
      %p206 = por %p204, %p205
      %p207 = scmp.ne.s32.totalorder %s196, %s199
      %p208 = scmp.eq.s32.totalorder %s23, 1
      %p209 = por %p207, %p208
      %p210 = scmp.ne.s32.totalorder %s199, %s200
      %p211 = scmp.eq.s32.totalorder %s23, 0
      %p212 = por %p210, %p211
      %p213 = scmp.ne.s32.totalorder %s199, %s200
      %p214 = scmp.eq.s32.totalorder %s24, 1
      %p215 = por %p213, %p214
      %p217 = scmp.ne.s32.totalorder %s200, %s216
      %p218 = scmp.eq.s32.totalorder %s24, 0
      %p219 = por %p217, %p218
      %s220 = ssub.s32 %s26, %s33
      %p221 = scmp.eq.s32.totalorder %s220, 0
      %s223 = sadd.s32 %s222, 1
      %s224 = scalar_select %p221, %s222, %s223
      %p227 = pneg %p221
      %p228 = scmp.eq.s32.totalorder %s18, 1
      %p229 = por %p227, %p228
      %p230 = scmp.ne.s32.totalorder %s222, %s225
      %p231 = scmp.eq.s32.totalorder %s18, 0
      %p232 = por %p230, %p231
      %p233 = scmp.ne.s32.totalorder %s222, %s225
      %p234 = scmp.eq.s32.totalorder %s23, 1
      %p235 = por %p233, %p234
      %p236 = scmp.ne.s32.totalorder %s225, %s226
      %p237 = scmp.eq.s32.totalorder %s23, 0
      %p238 = por %p236, %p237
      %p239 = scmp.ne.s32.totalorder %s225, %s226
      %p240 = scmp.eq.s32.totalorder %s24, 1
      %p241 = por %p239, %p240
      %p243 = scmp.ne.s32.totalorder %s226, %s242
      %p244 = scmp.eq.s32.totalorder %s24, 0
      %p245 = por %p243, %p244
      %s246 = ssub.s32 %s25, %s37
      %p247 = scmp.eq.s32.totalorder %s246, 0
      %s249 = sadd.s32 %s248, 1
      %s250 = scalar_select %p247, %s248, %s249
      %p253 = pneg %p247
      %p254 = scmp.eq.s32.totalorder %s18, 1
      %p255 = por %p253, %p254
      %p256 = scmp.ne.s32.totalorder %s248, %s251
      %p257 = scmp.eq.s32.totalorder %s18, 0
      %p258 = por %p256, %p257
      %p259 = scmp.ne.s32.totalorder %s248, %s251
      %p260 = scmp.eq.s32.totalorder %s23, 1
      %p261 = por %p259, %p260
      %p262 = scmp.ne.s32.totalorder %s251, %s252
      %p263 = scmp.eq.s32.totalorder %s23, 0
      %p264 = por %p262, %p263
      %p265 = scmp.ne.s32.totalorder %s251, %s252
      %p266 = scmp.eq.s32.totalorder %s24, 1
      %p267 = por %p265, %p266
      %p269 = scmp.ne.s32.totalorder %s252, %s268
      %p270 = scmp.eq.s32.totalorder %s24, 0
      %p271 = por %p269, %p270
      %s272 = ssub.s32 %s25, %s37
      %p273 = scmp.eq.s32.totalorder %s272, 0
      %s275 = sadd.s32 %s274, 1
      %s276 = scalar_select %p273, %s274, %s275
      %p279 = pneg %p273
      %p280 = scmp.eq.s32.totalorder %s18, 1
      %p281 = por %p279, %p280
      %p282 = scmp.ne.s32.totalorder %s274, %s277
      %p283 = scmp.eq.s32.totalorder %s18, 0
      %p284 = por %p282, %p283
      %p285 = scmp.ne.s32.totalorder %s274, %s277
      %p286 = scmp.eq.s32.totalorder %s23, 1
      %p287 = por %p285, %p286
      %p288 = scmp.ne.s32.totalorder %s277, %s278
      %p289 = scmp.eq.s32.totalorder %s23, 0
      %p290 = por %p288, %p289
      %p291 = scmp.ne.s32.totalorder %s277, %s278
      %p292 = scmp.eq.s32.totalorder %s24, 1
      %p293 = por %p291, %p292
      %p295 = scmp.ne.s32.totalorder %s278, %s294
      %p296 = scmp.eq.s32.totalorder %s24, 0
      %p297 = por %p295, %p296
      %p298 = scmp.le.s32.totalorder 1, %s18
      %p299 = scmp.lt.s32.totalorder %s18, 3
      %p300 = pnand %p298, %p299
      %p301 = pneg %p300
      // Predicated region
      $region9: #{tpu_custom_call.1} parent=5 // pred_check
        _
      $region10: #{tpu_custom_call.1} parent=5 // pred_check_branch
        %303 = sbr.rel (%p300) target = $region12
      $region11: #{tpu_custom_call.1} parent=5 // pred_region
        %s304 = ssub.s32 %s18, 1
        // Predicated region
        $region13: #{tpu_custom_call.1} parent=11 // pred_check
          %p305 = pneg %p56
        $region14: #{tpu_custom_call.1} parent=11 // pred_check_branch
          %307 = sbr.rel (%p305) target = $region16
        $region15: #{tpu_custom_call.1} parent=11 // pred_region
          %s308 = smul.u32 2, %s27
          %p309 = scmp.lt.s32.totalorder %s308, 1
          %s310 = scalar_select %p309, %s308, 1
          %s311 = smul.addr %s310, 8
          %s312 = scalar_lea.vmem %s0, %s311
          %s313 = smul.u32 2, %s27
        $region16: #{tpu_custom_call.1} parent=11 // pred_fallthru
          _
      $region12: #{tpu_custom_call.1} parent=5 // pred_fallthru
        _
      %p314 = scmp.lt.s32.totalorder %s18, 2
      // Predicated region
      $region17: #{tpu_custom_call.1} parent=5 // pred_check
        %p315 = pneg %p314
      $region18: #{tpu_custom_call.1} parent=5 // pred_check_branch
        %317 = sbr.rel (%p315) target = $region20
      $region19: #{tpu_custom_call.1} parent=5 // pred_region
        // Predicated region
        $region21: #{tpu_custom_call.1} parent=19 // pred_check
          %p318 = pneg %p76
        $region22: #{tpu_custom_call.1} parent=19 // pred_check_branch
          %320 = sbr.rel (%p318) target = $region24
        $region23: #{tpu_custom_call.1} parent=19 // pred_region
          %p321 = scmp.lt.s32.totalorder %s26, 1
          %s322 = scalar_select %p321, %s26, 1
          %s323 = smul.addr %s322, 8
          %s324 = scalar_lea.vmem %s1, %s323
        $region24: #{tpu_custom_call.1} parent=19 // pred_fallthru
          _
        // Predicated region
        $region25: #{tpu_custom_call.1} parent=19 // pred_check
          %p325 = pneg %p102
        $region26: #{tpu_custom_call.1} parent=19 // pred_check_branch
          %327 = sbr.rel (%p325) target = $region28
        $region27: #{tpu_custom_call.1} parent=19 // pred_region
          %p328 = scmp.lt.s32.totalorder %s26, 1
          %s329 = scalar_select %p328, %s26, 1
          %s330 = smul.addr %s329, 4
          %s331 = smul.addr %s330, 4
          %s332 = scalar_lea.vmem %s2, %s331
        $region28: #{tpu_custom_call.1} parent=19 // pred_fallthru
          _
        // Predicated region
        $region29: #{tpu_custom_call.1} parent=19 // pred_check
          %p333 = pneg %p128
        $region30: #{tpu_custom_call.1} parent=19 // pred_check_branch
          %335 = sbr.rel (%p333) target = $region32
        $region31: #{tpu_custom_call.1} parent=19 // pred_region
          %p336 = scmp.lt.s32.totalorder %s26, 1
          %s337 = scalar_select %p336, %s26, 1
          %s338 = scalar_lea.vmem %s3, %s337
        $region32: #{tpu_custom_call.1} parent=19 // pred_fallthru
          _
        // Predicated region
        $region33: #{tpu_custom_call.1} parent=19 // pred_check
          %p339 = pneg %p154
        $region34: #{tpu_custom_call.1} parent=19 // pred_check_branch
          %341 = sbr.rel (%p339) target = $region36
        $region35: #{tpu_custom_call.1} parent=19 // pred_region
          %p342 = scmp.lt.s32.totalorder %s26, 1
          %s343 = scalar_select %p342, %s26, 1
          %s344 = smul.addr %s343, 4
          %s345 = smul.addr %s344, 4
          %s346 = scalar_lea.vmem %s4, %s345
        $region36: #{tpu_custom_call.1} parent=19 // pred_fallthru
          _
        // Predicated region
        $region37: #{tpu_custom_call.1} parent=19 // pred_check
          %p347 = pneg %p180
        $region38: #{tpu_custom_call.1} parent=19 // pred_check_branch
          %349 = sbr.rel (%p347) target = $region40
        $region39: #{tpu_custom_call.1} parent=19 // pred_region
          %p350 = scmp.lt.s32.totalorder %s26, 1
          %s351 = scalar_select %p350, %s26, 1
          %s352 = smul.addr %s351, 4
          %s353 = smul.addr %s352, 4
          %s354 = scalar_lea.vmem %s5, %s353
        $region40: #{tpu_custom_call.1} parent=19 // pred_fallthru
          _
        // Predicated region
        $region41: #{tpu_custom_call.1} parent=19 // pred_check
          %p355 = pneg %p206
        $region42: #{tpu_custom_call.1} parent=19 // pred_check_branch
          %357 = sbr.rel (%p355) target = $region44
        $region43: #{tpu_custom_call.1} parent=19 // pred_region
          %p358 = scmp.lt.s32.totalorder %s26, 1
          %s359 = scalar_select %p358, %s26, 1
          %s360 = scalar_lea.vmem %s6, %s359
        $region44: #{tpu_custom_call.1} parent=19 // pred_fallthru
          _
        // Predicated region
        $region45: #{tpu_custom_call.1} parent=19 // pred_check
          %p361 = pneg %p232
        $region46: #{tpu_custom_call.1} parent=19 // pred_check_branch
          %363 = sbr.rel (%p361) target = $region48
        $region47: #{tpu_custom_call.1} parent=19 // pred_region
          %p364 = scmp.lt.s32.totalorder %s26, 1
          %s365 = scalar_select %p364, %s26, 1
          %s366 = smul.addr %s365, 16
          %s367 = smul.addr %s366, 4
          %s368 = scalar_lea.vmem %s7, %s367
        $region48: #{tpu_custom_call.1} parent=19 // pred_fallthru
          _
      $region20: #{tpu_custom_call.1} parent=5 // pred_fallthru
        _
      %p369 = scmp.le.s32.totalorder 1, %s18
      %p370 = scmp.lt.s32.totalorder %s18, 3
      %p371 = pnand %p369, %p370
      %p372 = pneg %p371
      // Predicated region
      $region49: #{tpu_custom_call.1} parent=5 // pred_check
        _
      $region50: #{tpu_custom_call.1} parent=5 // pred_check_branch
        %374 = sbr.rel (%p371) target = $region52
      $region51: #{tpu_custom_call.1} parent=5 // pred_region
        %s375 = ssub.s32 %s18, 1
        %s376 = smul.u32 2, %s27
        %p377 = scmp.lt.s32.totalorder %s376, 1
        %s378 = scalar_select %p377, %s376, 1
        %s379 = smul.addr %s378, 8
        %s380 = scalar_lea.vmem %s0, %s379
        %p381 = pneg %p56
        %p382 = pneg %p53
        %p383 = scmp.lt.s32.totalorder %s28, 1
        %s384 = scalar_select %p383, %s28, 1
        %s385 = smul.addr %s384, 8
        %s386 = scalar_lea.vmem %s1, %s385
        %p387 = pneg %p82
        %p388 = pneg %p79
        %p389 = scmp.lt.s32.totalorder %s28, 1
        %s390 = scalar_select %p389, %s28, 1
        %s391 = smul.addr %s390, 4
        %s392 = smul.addr %s391, 4
        %s393 = scalar_lea.vmem %s2, %s392
        %p394 = pneg %p108
        %p395 = pneg %p105
        %p396 = scmp.lt.s32.totalorder %s28, 1
        %s397 = scalar_select %p396, %s28, 1
        %s398 = scalar_lea.vmem %s3, %s397
        %p399 = pneg %p134
        %p400 = pneg %p131
        %p401 = scmp.lt.s32.totalorder %s28, 1
        %s402 = scalar_select %p401, %s28, 1
        %s403 = smul.addr %s402, 4
        %s404 = smul.addr %s403, 4
        %s405 = scalar_lea.vmem %s4, %s404
        %p406 = pneg %p160
        %p407 = pneg %p157
        %p408 = scmp.lt.s32.totalorder %s28, 1
        %s409 = scalar_select %p408, %s28, 1
        %s410 = smul.addr %s409, 4
        %s411 = smul.addr %s410, 4
        %s412 = scalar_lea.vmem %s5, %s411
        %p413 = pneg %p186
        %p414 = pneg %p183
        %p415 = scmp.lt.s32.totalorder %s28, 1
        %s416 = scalar_select %p415, %s28, 1
        %s417 = scalar_lea.vmem %s6, %s416
        %p418 = pneg %p212
        %p419 = pneg %p209
        %p420 = scmp.lt.s32.totalorder %s28, 1
        %s421 = scalar_select %p420, %s28, 1
        %s422 = smul.addr %s421, 16
        %s423 = smul.addr %s422, 4
        %s424 = scalar_lea.vmem %s7, %s423
        %p425 = pneg %p238
        %p426 = pneg %p235
        %p427 = pneg %p264
        %p428 = pneg %p261
        %p429 = pneg %p290
        %p430 = pneg %p287
        %s431 = smul.u32 2, %s27
        %p432 = scmp.lt.s32.totalorder %s431, 1
        %s433 = scalar_select %p432, %s431, 1
        %s434 = smul.addr %s433, 8
        %s435 = scalar_lea.vmem %s0, %s434
        %s436 = smul.u32 2, %s27
        %p437 = scmp.lt.s32.totalorder %s28, 1
        %s438 = scalar_select %p437, %s28, 1
        %s439 = smul.addr %s438, 8
        %s440 = scalar_lea.vmem %s1, %s439
        %p441 = scmp.lt.s32.totalorder %s28, 1
        %s442 = scalar_select %p441, %s28, 1
        %s443 = smul.addr %s442, 4
        %s444 = smul.addr %s443, 4
        %s445 = scalar_lea.vmem %s2, %s444
        %p446 = scmp.lt.s32.totalorder %s28, 1
        %s447 = scalar_select %p446, %s28, 1
        %s448 = scalar_lea.vmem %s3, %s447
        %p449 = scmp.lt.s32.totalorder %s28, 1
        %s450 = scalar_select %p449, %s28, 1
        %s451 = smul.addr %s450, 4
        %s452 = smul.addr %s451, 4
        %s453 = scalar_lea.vmem %s4, %s452
        %p454 = scmp.lt.s32.totalorder %s28, 1
        %s455 = scalar_select %p454, %s28, 1
        %s456 = smul.addr %s455, 4
        %s457 = smul.addr %s456, 4
        %s458 = scalar_lea.vmem %s5, %s457
        %p459 = scmp.lt.s32.totalorder %s28, 1
        %s460 = scalar_select %p459, %s28, 1
        %s461 = scalar_lea.vmem %s6, %s460
        %p462 = scmp.lt.s32.totalorder %s28, 1
        %s463 = scalar_select %p462, %s28, 1
        %s464 = smul.addr %s463, 16
        %s465 = smul.addr %s464, 4
        %s466 = scalar_lea.vmem %s7, %s465
        %s467 = smul.u32 2, %s27
        %s468 = smul.u32 2, %s27
        %p470 = scmp.eq.s32.totalorder %s28, 0
        // Predicated region
        $region53: #{tpu_custom_call.1} parent=51 // pred_check
          %p471 = pneg %p470
        $region54: #{tpu_custom_call.1} parent=51 // pred_check_branch
          %473 = sbr.rel (%p471) target = $region56
        $region55: #{tpu_custom_call.1} parent=51 // pred_region
          %v474 = vld [vmem:[%s435] sm:$0xff]
          %v475 = vld [vmem:[%s435 + $0x8] sm:$0xff]
          %vm476 = vcmask 261120
          %477 = vst.msk [vmem:[#allocation2] sm:$0xff] %vm476, %v474
          %478 = vst.msk [vmem:[#allocation2 + $0x8] sm:$0xff] %vm476, %v475
        $region56: #{tpu_custom_call.1} parent=51 // pred_fallthru
          _
        %v479 = vld [vmem:[%s440] sm:$0xff]
        %v480 = vld [vmem:[%s445] sm:$0xf]
        %v481 = vld [vmem:[%s445 + $0x4] sm:$0xf]
        %v482 = vld [vmem:[%s445 + $0x8] sm:$0xf]
        %v483 = vld [vmem:[%s445 + $0xc] sm:$0xf]
        %v484 = vld [vmem:[%s448] sm:$0x1]
        %v485 = vld [vmem:[%s453] sm:$0xf]
        %v486 = vld [vmem:[%s453 + $0x4] sm:$0xf]
        %v487 = vld [vmem:[%s453 + $0x8] sm:$0xf]
        %v488 = vld [vmem:[%s453 + $0xc] sm:$0xf]
        %v489 = vld [vmem:[%s458] sm:$0xf]
        %v490 = vld [vmem:[%s458 + $0x4] sm:$0xf]
        %v491 = vld [vmem:[%s458 + $0x8] sm:$0xf]
        %v492 = vld [vmem:[%s458 + $0xc] sm:$0xf]
        %v493 = vld [vmem:[%s461] sm:$0x1]
        %v494 = vld [vmem:[%s466] sm:$0xf]
        %v495 = vld [vmem:[%s466 + $0x4] sm:$0xf]
        %v496 = vld [vmem:[%s466 + $0x8] sm:$0xf]
        %v497 = vld [vmem:[%s466 + $0xc] sm:$0xf]
        %v498 = vld [vmem:[%s466 + $0x10] sm:$0xf]
        %v499 = vld [vmem:[%s466 + $0x14] sm:$0xf]
        %v500 = vld [vmem:[%s466 + $0x18] sm:$0xf]
        %v501 = vld [vmem:[%s466 + $0x1c] sm:$0xf]
        %v502 = vld [vmem:[%s466 + $0x20] sm:$0xf]
        %v503 = vld [vmem:[%s466 + $0x24] sm:$0xf]
        %v504 = vld [vmem:[%s466 + $0x28] sm:$0xf]
        %v505 = vld [vmem:[%s466 + $0x2c] sm:$0xf]
        %v506 = vld [vmem:[%s466 + $0x30] sm:$0xf]
        %v507 = vld [vmem:[%s466 + $0x34] sm:$0xf]
        %v508 = vld [vmem:[%s466 + $0x38] sm:$0xf]
        %v509 = vld [vmem:[%s466 + $0x3c] sm:$0xf]
        %v510 = vld [vmem:[#allocation2] sm:$0xff]
        %vm511 = vcmask 261120
        %v512 = vsel %vm511, %v510, 0.0
        %513 = vadd.xlane.f32.xlu0 %v512
        %v514 = vpop.xlane.xlu0 %513
        %v515 = vrcp.pop 32.0
        %v516 = vmul.f32 32.0, %v515
        %v517 = vsub.f32 1.0, %v516
        %v518 = vmul.f32 %v515, %v517
        %v519 = vadd.f32 %v515, %v518
        %vm520 = vweird.f32 %v515
        %v521 = vsel %vm520, %v515, %v519
        %v522 = vmul.f32 %v514, %v521
        %v523 = vsub.f32 %v510, %v522
        %v524 = vmul.f32 %v523, %v523
        %v525 = vsel %vm511, %v524, 0.0
        %526 = vadd.xlane.f32.xlu0 %v525
        %v527 = vpop.xlane.xlu0 %526
        %v528 = vmul.f32 %v527, %v521
        %v529 = vadd.f32 %v528, 1e-05
        %v530 = vrsqrt.pop %v529
        %v531 = vmul.f32 %v530, %v529
        %v532 = vmul.f32 %v531, %v530
        %v533 = vmul.f32 0.5, %v532
        %v534 = vsub.f32 1.5, %v533
        %v535 = vmul.f32 %v530, %v534
        %vm536 = vweird.f32 %v529
        %vm537 = vweird.f32 %v530
        %vm538 = vmor %vm536, %vm537
        %v539 = vsel %vm538, %v530, %v535
        %v540 = vmul.f32 %v523, %v539
        %v541 = vperm.slane %v479, 0
        %v542 = vmul.f32 %v540, %v541
        %v543 = vperm.slane %v479, 1
        %v544 = vadd.f32 %v542, %v543
        %v545 = vpack.c.bf16 %v544, %v544
        %v547 = vperm.slane %v484, 0
        %v553 = vunpack.c.l.b16 %v480
        %v554 = vunpack.c.l.b16 %v481
        %v555 = vunpack.c.l.b16 %v482
        %v556 = vunpack.c.l.b16 %v483
        %v557 = vpack.c.b16 %v554, %v553
        %v558 = vpack.c.b16 %v556, %v555
        %v562 = vsel %vm511, %v545, 0
        %564 = vmatpush.bf16.msra.mxu0 0
        %565 = vmatpush.bf16.msra.mxu0 0
        %566 = vmatpush.bf16.msra.mxu0 0
        %567 = vmatpush.bf16.msra.mxu0 0
        %568 = vmatpush.bf16.msra.mxu0 0
        %569 = vmatpush.bf16.msra.mxu0 0
        %570 = vmatpush.bf16.msra.mxu0 %v558
        %571 = vmatpush.bf16.msra.mxu0 %v557
        %572 = vmatmul.bf16.gmra.mxu0 %v562
        %v573 = vpop.f32.mrf.mxu0
        %v574 = vadd.f32 %v547, %v573
        %v575 = vpop.f32.mrf.mxu0
        %576 = vdwg.mxu0
        %v577 = vpack.c.bf16 %v574, %v574
        %579 = vrot.lane.b32.xlu0 %v577, 120
        %v580 = vpop.permute.xlu0 %579
        %581 = vrot.lane.b32.xlu0 %v577, 112
        %v582 = vpop.permute.xlu0 %581
        %583 = vrot.lane.b32.xlu0 %v577, 104
        %v584 = vpop.permute.xlu0 %583
        %v587 = vpack.i.b16 %v580, %v577
        %v588 = vshrl.u32 %v577, 16
        %v589 = vshrl.u32 %v580, 16
        %v590 = vpack.i.b16 %v589, %v588
        %v593 = vpack.i.b16 %v584, %v582
        %v594 = vshrl.u32 %v582, 16
        %v595 = vshrl.u32 %v584, 16
        %v596 = vpack.i.b16 %v595, %v594
        %v599 = vunpack.c.l.s4 1983009808
        %v600 = vunpack.c.0.s8 %v599
        %v601 = vperm.slane %v587, %v600
        %v604 = vunpack.c.l.s4 1983009808
        %v605 = vunpack.c.0.s8 %v604
        %v606 = vperm.slane %v593, %v605
        %v607 = vrot.slane %v606, 4
        %vm608 = vcmask 1047556
        %v609 = vsel %vm608, %v607, %v601
        %v610 = vrot.slane %v601, 4
        %v611 = vsel %vm608, %v606, %v610
        %v613 = vunpack.c.l.s4 1934713408
        %v614 = vunpack.c.0.s8 %v613
        %v615 = vperm.slane %v609, %v614
        %v617 = vunpack.c.l.s4 1934713408
        %v618 = vunpack.c.0.s8 %v617
        %v619 = vperm.slane %v611, %v618
        %v620 = vrot.slane %v615, 4
        %v621 = vsel %vm608, 0, %v620
        %v622 = vrot.slane %v619, 4
        %v623 = vsel %vm608, 0, %v622
        %v626 = vunpack.c.l.s4 1983009808
        %v627 = vunpack.c.0.s8 %v626
        %v628 = vperm.slane %v590, %v627
        %v631 = vunpack.c.l.s4 1983009808
        %v632 = vunpack.c.0.s8 %v631
        %v633 = vperm.slane %v596, %v632
        %v634 = vrot.slane %v633, 4
        %v635 = vsel %vm608, %v634, %v628
        %v636 = vrot.slane %v628, 4
        %v637 = vsel %vm608, %v633, %v636
        %v639 = vunpack.c.l.s4 1934713408
        %v640 = vunpack.c.0.s8 %v639
        %v641 = vperm.slane %v635, %v640
        %v643 = vunpack.c.l.s4 1934713408
        %v644 = vunpack.c.0.s8 %v643
        %v645 = vperm.slane %v637, %v644
        %v646 = vrot.slane %v641, 4
        %v647 = vsel %vm608, 0, %v646
        %v648 = vrot.slane %v645, 4
        %v649 = vsel %vm608, 0, %v648
        %v650 = vsel %vm608, %v622, %v615
        %v652 = vunpack.c.l.s4 1983009808
        %v653 = vunpack.c.0.s8 %v652
        %v654 = vperm.slane %v650, %v653
        %v655 = vrot.slane %v623, 4
        %v656 = vsel %vm608, %v655, %v621
        %v658 = vunpack.c.l.s4 1983009808
        %v659 = vunpack.c.0.s8 %v658
        %v660 = vperm.slane %v656, %v659
        %v661 = vrot.slane %v660, 4
        %v662 = vsel %vm608, %v661, %v654
        %v664 = vunpack.c.l.s4 1934713408
        %v665 = vunpack.c.0.s8 %v664
        %v666 = vperm.slane %v662, %v665
        %v667 = vrot.slane %v666, 4
        %v668 = vsel %vm608, 0, %v667
        %v669 = vsel %vm608, %v648, %v641
        %v671 = vunpack.c.l.s4 1983009808
        %v672 = vunpack.c.0.s8 %v671
        %v673 = vperm.slane %v669, %v672
        %v674 = vrot.slane %v649, 4
        %v675 = vsel %vm608, %v674, %v647
        %v677 = vunpack.c.l.s4 1983009808
        %v678 = vunpack.c.0.s8 %v677
        %v679 = vperm.slane %v675, %v678
        %v680 = vrot.slane %v679, 4
        %v681 = vsel %vm608, %v680, %v673
        %v683 = vunpack.c.l.s4 1934713408
        %v684 = vunpack.c.0.s8 %v683
        %v685 = vperm.slane %v681, %v684
        %v686 = vrot.slane %v685, 4
        %v687 = vsel %vm608, 0, %v686
        %v690 = vpack.i.b16 %v685, %v666
        %v691 = vshrl.u32 %v666, 16
        %v692 = vshrl.u32 %v685, 16
        %v693 = vpack.i.b16 %v692, %v691
        %v696 = vpack.i.b16 %v687, %v668
        %v697 = vshrl.u32 %v668, 16
        %v698 = vshrl.u32 %v687, 16
        %v699 = vpack.i.b16 %v698, %v697
        %700 = vrot.lane.b32.xlu0 %v577, 96
        %v701 = vpop.permute.xlu0 %700
        %702 = vrot.lane.b32.xlu0 %v580, 96
        %v703 = vpop.permute.xlu0 %702
        %704 = vrot.lane.b32.xlu0 %v582, 96
        %v705 = vpop.permute.xlu0 %704
        %706 = vrot.lane.b32.xlu0 %v584, 96
        %v707 = vpop.permute.xlu0 %706
        %v710 = vpack.i.b16 %v703, %v701
        %v711 = vshrl.u32 %v701, 16
        %v712 = vshrl.u32 %v703, 16
        %v713 = vpack.i.b16 %v712, %v711
        %v716 = vpack.i.b16 %v707, %v705
        %v717 = vshrl.u32 %v705, 16
        %v718 = vshrl.u32 %v707, 16
        %v719 = vpack.i.b16 %v718, %v717
        %v722 = vunpack.c.l.s4 1983009808
        %v723 = vunpack.c.0.s8 %v722
        %v724 = vperm.slane %v710, %v723
        %v727 = vunpack.c.l.s4 1983009808
        %v728 = vunpack.c.0.s8 %v727
        %v729 = vperm.slane %v716, %v728
        %v730 = vrot.slane %v729, 4
        %v731 = vsel %vm608, %v730, %v724
        %v732 = vrot.slane %v724, 4
        %v733 = vsel %vm608, %v729, %v732
        %v735 = vunpack.c.l.s4 1934713408
        %v736 = vunpack.c.0.s8 %v735
        %v737 = vperm.slane %v731, %v736
        %v739 = vunpack.c.l.s4 1934713408
        %v740 = vunpack.c.0.s8 %v739
        %v741 = vperm.slane %v733, %v740
        %v742 = vrot.slane %v737, 4
        %v743 = vsel %vm608, 0, %v742
        %v744 = vrot.slane %v741, 4
        %v745 = vsel %vm608, 0, %v744
        %v748 = vunpack.c.l.s4 1983009808
        %v749 = vunpack.c.0.s8 %v748
        %v750 = vperm.slane %v713, %v749
        %v753 = vunpack.c.l.s4 1983009808
        %v754 = vunpack.c.0.s8 %v753
        %v755 = vperm.slane %v719, %v754
        %v756 = vrot.slane %v755, 4
        %v757 = vsel %vm608, %v756, %v750
        %v758 = vrot.slane %v750, 4
        %v759 = vsel %vm608, %v755, %v758
        %v761 = vunpack.c.l.s4 1934713408
        %v762 = vunpack.c.0.s8 %v761
        %v763 = vperm.slane %v757, %v762
        %v765 = vunpack.c.l.s4 1934713408
        %v766 = vunpack.c.0.s8 %v765
        %v767 = vperm.slane %v759, %v766
        %v768 = vrot.slane %v763, 4
        %v769 = vsel %vm608, 0, %v768
        %v770 = vrot.slane %v767, 4
        %v771 = vsel %vm608, 0, %v770
        %v772 = vsel %vm608, %v744, %v737
        %v774 = vunpack.c.l.s4 1983009808
        %v775 = vunpack.c.0.s8 %v774
        %v776 = vperm.slane %v772, %v775
        %v777 = vrot.slane %v745, 4
        %v778 = vsel %vm608, %v777, %v743
        %v780 = vunpack.c.l.s4 1983009808
        %v781 = vunpack.c.0.s8 %v780
        %v782 = vperm.slane %v778, %v781
        %v783 = vrot.slane %v782, 4
        %v784 = vsel %vm608, %v783, %v776
        %v786 = vunpack.c.l.s4 1934713408
        %v787 = vunpack.c.0.s8 %v786
        %v788 = vperm.slane %v784, %v787
        %v789 = vrot.slane %v788, 4
        %v790 = vsel %vm608, 0, %v789
        %v791 = vsel %vm608, %v770, %v763
        %v793 = vunpack.c.l.s4 1983009808
        %v794 = vunpack.c.0.s8 %v793
        %v795 = vperm.slane %v791, %v794
        %v796 = vrot.slane %v771, 4
        %v797 = vsel %vm608, %v796, %v769
        %v799 = vunpack.c.l.s4 1983009808
        %v800 = vunpack.c.0.s8 %v799
        %v801 = vperm.slane %v797, %v800
        %v802 = vrot.slane %v801, 4
        %v803 = vsel %vm608, %v802, %v795
        %v805 = vunpack.c.l.s4 1934713408
        %v806 = vunpack.c.0.s8 %v805
        %v807 = vperm.slane %v803, %v806
        %v808 = vrot.slane %v807, 4
        %v809 = vsel %vm608, 0, %v808
        %v812 = vpack.i.b16 %v807, %v788
        %v813 = vshrl.u32 %v788, 16
        %v814 = vshrl.u32 %v807, 16
        %v815 = vpack.i.b16 %v814, %v813
        %v818 = vpack.i.b16 %v809, %v790
        %v819 = vshrl.u32 %v790, 16
        %v820 = vshrl.u32 %v809, 16
        %v821 = vpack.i.b16 %v820, %v819
        %822 = vrot.lane.b32.xlu0 %v577, 64
        %v823 = vpop.permute.xlu0 %822
        %824 = vrot.lane.b32.xlu0 %v580, 64
        %v825 = vpop.permute.xlu0 %824
        %826 = vrot.lane.b32.xlu0 %v582, 64
        %v827 = vpop.permute.xlu0 %826
        %828 = vrot.lane.b32.xlu0 %v584, 64
        %v829 = vpop.permute.xlu0 %828
        %v832 = vpack.i.b16 %v825, %v823
        %v833 = vshrl.u32 %v823, 16
        %v834 = vshrl.u32 %v825, 16
        %v835 = vpack.i.b16 %v834, %v833
        %v838 = vpack.i.b16 %v829, %v827
        %v839 = vshrl.u32 %v827, 16
        %v840 = vshrl.u32 %v829, 16
        %v841 = vpack.i.b16 %v840, %v839
        %v844 = vunpack.c.l.s4 1983009808
        %v845 = vunpack.c.0.s8 %v844
        %v846 = vperm.slane %v832, %v845
        %v849 = vunpack.c.l.s4 1983009808
        %v850 = vunpack.c.0.s8 %v849
        %v851 = vperm.slane %v838, %v850
        %v852 = vrot.slane %v851, 4
        %v853 = vsel %vm608, %v852, %v846
        %v854 = vrot.slane %v846, 4
        %v855 = vsel %vm608, %v851, %v854
        %v857 = vunpack.c.l.s4 1934713408
        %v858 = vunpack.c.0.s8 %v857
        %v859 = vperm.slane %v853, %v858
        %v861 = vunpack.c.l.s4 1934713408
        %v862 = vunpack.c.0.s8 %v861
        %v863 = vperm.slane %v855, %v862
        %v864 = vrot.slane %v859, 4
        %v865 = vsel %vm608, 0, %v864
        %v866 = vrot.slane %v863, 4
        %v867 = vsel %vm608, 0, %v866
        %v870 = vunpack.c.l.s4 1983009808
        %v871 = vunpack.c.0.s8 %v870
        %v872 = vperm.slane %v835, %v871
        %v875 = vunpack.c.l.s4 1983009808
        %v876 = vunpack.c.0.s8 %v875
        %v877 = vperm.slane %v841, %v876
        %v878 = vrot.slane %v877, 4
        %v879 = vsel %vm608, %v878, %v872
        %v880 = vrot.slane %v872, 4
        %v881 = vsel %vm608, %v877, %v880
        %v883 = vunpack.c.l.s4 1934713408
        %v884 = vunpack.c.0.s8 %v883
        %v885 = vperm.slane %v879, %v884
        %v887 = vunpack.c.l.s4 1934713408
        %v888 = vunpack.c.0.s8 %v887
        %v889 = vperm.slane %v881, %v888
        %v890 = vrot.slane %v885, 4
        %v891 = vsel %vm608, 0, %v890
        %v892 = vrot.slane %v889, 4
        %v893 = vsel %vm608, 0, %v892
        %v894 = vsel %vm608, %v866, %v859
        %v896 = vunpack.c.l.s4 1983009808
        %v897 = vunpack.c.0.s8 %v896
        %v898 = vperm.slane %v894, %v897
        %v899 = vrot.slane %v867, 4
        %v900 = vsel %vm608, %v899, %v865
        %v902 = vunpack.c.l.s4 1983009808
        %v903 = vunpack.c.0.s8 %v902
        %v904 = vperm.slane %v900, %v903
        %v905 = vrot.slane %v904, 4
        %v906 = vsel %vm608, %v905, %v898
        %v908 = vunpack.c.l.s4 1934713408
        %v909 = vunpack.c.0.s8 %v908
        %v910 = vperm.slane %v906, %v909
        %v911 = vrot.slane %v910, 4
        %v912 = vsel %vm608, 0, %v911
        %v913 = vsel %vm608, %v892, %v885
        %v915 = vunpack.c.l.s4 1983009808
        %v916 = vunpack.c.0.s8 %v915
        %v917 = vperm.slane %v913, %v916
        %v918 = vrot.slane %v893, 4
        %v919 = vsel %vm608, %v918, %v891
        %v921 = vunpack.c.l.s4 1983009808
        %v922 = vunpack.c.0.s8 %v921
        %v923 = vperm.slane %v919, %v922
        %v924 = vrot.slane %v923, 4
        %v925 = vsel %vm608, %v924, %v917
        %v927 = vunpack.c.l.s4 1934713408
        %v928 = vunpack.c.0.s8 %v927
        %v929 = vperm.slane %v925, %v928
        %v930 = vrot.slane %v929, 4
        %v931 = vsel %vm608, 0, %v930
        %v934 = vpack.i.b16 %v929, %v910
        %v935 = vshrl.u32 %v910, 16
        %v936 = vshrl.u32 %v929, 16
        %v937 = vpack.i.b16 %v936, %v935
        %v940 = vpack.i.b16 %v931, %v912
        %v941 = vshrl.u32 %v912, 16
        %v942 = vshrl.u32 %v931, 16
        %v943 = vpack.i.b16 %v942, %v941
        %vm944 = vcmask 64512
        %v946 = vsel %vm944, %v690, 0
        %v949 = vsel %vm944, %v812, 0
        %951 = vmatpush.bf16.xpose.msra.mxu0 0
        %952 = vmatpush.bf16.xpose.msra.mxu0 0
        %953 = vmatpush.bf16.xpose.msra.mxu0 0
        %954 = vmatpush.bf16.xpose.msra.mxu0 0
        %955 = vmatpush.bf16.xpose.msra.mxu0 0
        %956 = vmatpush.bf16.xpose.msra.mxu0 0
        %957 = vmatpush.bf16.xpose.msra.mxu0 0
        %958 = vmatpush.bf16.xpose.msra.mxu0 %v949
        %959 = vmatmul.bf16.gmra.mxu0 %v946
        %v960 = vpop.f32.mrf.mxu0
        %v961 = vadd.f32 0.0, %v960
        %v962 = vpop.f32.mrf.mxu0
        %963 = vdwg.mxu0
        %v965 = vsel %vm944, %v693, 0
        %v968 = vsel %vm944, %v815, 0
        %970 = vmatpush.bf16.xpose.msra.mxu0 0
        %971 = vmatpush.bf16.xpose.msra.mxu0 0
        %972 = vmatpush.bf16.xpose.msra.mxu0 0
        %973 = vmatpush.bf16.xpose.msra.mxu0 0
        %974 = vmatpush.bf16.xpose.msra.mxu0 0
        %975 = vmatpush.bf16.xpose.msra.mxu0 0
        %976 = vmatpush.bf16.xpose.msra.mxu0 0
        %977 = vmatpush.bf16.xpose.msra.mxu0 %v968
        %978 = vmatmul.bf16.gmra.mxu0 %v965
        %v979 = vpop.f32.mrf.mxu0
        %v980 = vadd.f32 0.0, %v979
        %v981 = vpop.f32.mrf.mxu0
        %982 = vdwg.mxu0
        %v984 = vsel %vm944, %v696, 0
        %v987 = vsel %vm944, %v818, 0
        %989 = vmatpush.bf16.xpose.msra.mxu0 0
        %990 = vmatpush.bf16.xpose.msra.mxu0 0
        %991 = vmatpush.bf16.xpose.msra.mxu0 0
        %992 = vmatpush.bf16.xpose.msra.mxu0 0
        %993 = vmatpush.bf16.xpose.msra.mxu0 0
        %994 = vmatpush.bf16.xpose.msra.mxu0 0
        %995 = vmatpush.bf16.xpose.msra.mxu0 0
        %996 = vmatpush.bf16.xpose.msra.mxu0 %v987
        %997 = vmatmul.bf16.gmra.mxu0 %v984
        %v998 = vpop.f32.mrf.mxu0
        %v999 = vadd.f32 0.0, %v998
        %v1000 = vpop.f32.mrf.mxu0
        %1001 = vdwg.mxu0
        %v1003 = vsel %vm944, %v699, 0
        %v1006 = vsel %vm944, %v821, 0
        %1008 = vmatpush.bf16.xpose.msra.mxu0 0
        %1009 = vmatpush.bf16.xpose.msra.mxu0 0
        %1010 = vmatpush.bf16.xpose.msra.mxu0 0
        %1011 = vmatpush.bf16.xpose.msra.mxu0 0
        %1012 = vmatpush.bf16.xpose.msra.mxu0 0
        %1013 = vmatpush.bf16.xpose.msra.mxu0 0
        %1014 = vmatpush.bf16.xpose.msra.mxu0 0
        %1015 = vmatpush.bf16.xpose.msra.mxu0 %v1006
        %1016 = vmatmul.bf16.gmra.mxu0 %v1003
        %v1017 = vpop.f32.mrf.mxu0
        %v1018 = vadd.f32 0.0, %v1017
        %v1019 = vpop.f32.mrf.mxu0
        %1020 = vdwg.mxu0
        %v1021 = vsel %vm944, %v961, -inf
        %1022 = vmax.xlane.f32.xlu0 %v1021
        %v1023 = vpop.xlane.xlu0 %1022
        %v1024 = vsel %vm944, %v980, -inf
        %1025 = vmax.xlane.f32.xlu0 %v1024
        %v1026 = vpop.xlane.xlu0 %1025
        %v1027 = vsel %vm944, %v999, -inf
        %1028 = vmax.xlane.f32.xlu0 %v1027
        %v1029 = vpop.xlane.xlu0 %1028
        %v1030 = vsel %vm944, %v1018, -inf
        %1031 = vmax.xlane.f32.xlu0 %v1030
        %v1032 = vpop.xlane.xlu0 %1031
        %v1033 = vsub.f32 %v961, %v1023
        %v1034 = vsub.f32 %v980, %v1026
        %v1035 = vsub.f32 %v999, %v1029
        %v1036 = vsub.f32 %v1018, %v1032
        %v1037 = vmul.f32 %v1033, 1.442695
        %v1038 = vpow.pop %v1037
        %v1039 = vmul.f32 %v1034, 1.442695
        %v1040 = vpow.pop %v1039
        %v1041 = vmul.f32 %v1035, 1.442695
        %v1042 = vpow.pop %v1041
        %v1043 = vmul.f32 %v1036, 1.442695
        %v1044 = vpow.pop %v1043
        %v1045 = vsel %vm944, %v1038, 0.0
        %1046 = vadd.xlane.f32.xlu0 %v1045
        %v1047 = vpop.xlane.xlu0 %1046
        %v1048 = vsel %vm944, %v1040, 0.0
        %1049 = vadd.xlane.f32.xlu0 %v1048
        %v1050 = vpop.xlane.xlu0 %1049
        %v1051 = vsel %vm944, %v1042, 0.0
        %1052 = vadd.xlane.f32.xlu0 %v1051
        %v1053 = vpop.xlane.xlu0 %1052
        %v1054 = vsel %vm944, %v1044, 0.0
        %1055 = vadd.xlane.f32.xlu0 %v1054
        %v1056 = vpop.xlane.xlu0 %1055
        %v1057 = vrcp.pop %v1047
        %v1058 = vmul.f32 %v1047, %v1057
        %v1059 = vsub.f32 1.0, %v1058
        %v1060 = vmul.f32 %v1057, %v1059
        %v1061 = vadd.f32 %v1057, %v1060
        %vm1062 = vweird.f32 %v1047
        %vm1063 = vweird.f32 %v1057
        %vm1064 = vmor %vm1062, %vm1063
        %v1065 = vsel %vm1064, %v1057, %v1061
        %v1066 = vand.u32 2147483647, %v1047
        %vm1067 = vcmp.eq.f32.partialorder %v1066, 8.507059e+37
        %v1068 = vand.u32 %v1047, 2147483648
        %v1069 = vor.u32 1.1754944e-38, %v1068
        %v1070 = vsel %vm1067, %v1069, %v1065
        %v1071 = vmul.f32 %v1038, %v1070
        %v1072 = vrcp.pop %v1050
        %v1073 = vmul.f32 %v1050, %v1072
        %v1074 = vsub.f32 1.0, %v1073
        %v1075 = vmul.f32 %v1072, %v1074
        %v1076 = vadd.f32 %v1072, %v1075
        %vm1077 = vweird.f32 %v1050
        %vm1078 = vweird.f32 %v1072
        %vm1079 = vmor %vm1077, %vm1078
        %v1080 = vsel %vm1079, %v1072, %v1076
        %v1081 = vand.u32 2147483647, %v1050
        %vm1082 = vcmp.eq.f32.partialorder %v1081, 8.507059e+37
        %v1083 = vand.u32 %v1050, 2147483648
        %v1084 = vor.u32 1.1754944e-38, %v1083
        %v1085 = vsel %vm1082, %v1084, %v1080
        %v1086 = vmul.f32 %v1040, %v1085
        %v1087 = vrcp.pop %v1053
        %v1088 = vmul.f32 %v1053, %v1087
        %v1089 = vsub.f32 1.0, %v1088
        %v1090 = vmul.f32 %v1087, %v1089
        %v1091 = vadd.f32 %v1087, %v1090
        %vm1092 = vweird.f32 %v1053
        %vm1093 = vweird.f32 %v1087
        %vm1094 = vmor %vm1092, %vm1093
        %v1095 = vsel %vm1094, %v1087, %v1091
        %v1096 = vand.u32 2147483647, %v1053
        %vm1097 = vcmp.eq.f32.partialorder %v1096, 8.507059e+37
        %v1098 = vand.u32 %v1053, 2147483648
        %v1099 = vor.u32 1.1754944e-38, %v1098
        %v1100 = vsel %vm1097, %v1099, %v1095
        %v1101 = vmul.f32 %v1042, %v1100
        %v1102 = vrcp.pop %v1056
        %v1103 = vmul.f32 %v1056, %v1102
        %v1104 = vsub.f32 1.0, %v1103
        %v1105 = vmul.f32 %v1102, %v1104
        %v1106 = vadd.f32 %v1102, %v1105
        %vm1107 = vweird.f32 %v1056
        %vm1108 = vweird.f32 %v1102
        %vm1109 = vmor %vm1107, %vm1108
        %v1110 = vsel %vm1109, %v1102, %v1106
        %v1111 = vand.u32 2147483647, %v1056
        %vm1112 = vcmp.eq.f32.partialorder %v1111, 8.507059e+37
        %v1113 = vand.u32 %v1056, 2147483648
        %v1114 = vor.u32 1.1754944e-38, %v1113
        %v1115 = vsel %vm1112, %v1114, %v1110
        %v1116 = vmul.f32 %v1044, %v1115
        %v1117 = vpack.c.bf16 %v1071, %v1071
        %v1118 = vpack.c.bf16 %v1086, %v1086
        %v1119 = vpack.c.bf16 %v1101, %v1101
        %v1120 = vpack.c.bf16 %v1116, %v1116
        %v1122 = vsel %vm944, %v1117, 0
        %vm1124 = vcmask 1043456
        %v1126 = vsel %vm1124, %v934, 0
        %1128 = vmatpush.bf16.msra.mxu0 0
        %1129 = vmatpush.bf16.msra.mxu0 0
        %1130 = vmatpush.bf16.msra.mxu0 0
        %1131 = vmatpush.bf16.msra.mxu0 0
        %1132 = vmatpush.bf16.msra.mxu0 0
        %1133 = vmatpush.bf16.msra.mxu0 0
        %1134 = vmatpush.bf16.msra.mxu0 0
        %1135 = vmatpush.bf16.msra.mxu0 %v1126
        %1136 = vmatmul.bf16.gmra.mxu0 %v1122
        %v1137 = vpop.f32.mrf.mxu0
        %v1138 = vadd.f32 0.0, %v1137
        %v1139 = vpop.f32.mrf.mxu0
        %1140 = vdwg.mxu0
        %v1142 = vsel %vm944, %v1118, 0
        %v1145 = vsel %vm1124, %v937, 0
        %1147 = vmatpush.bf16.msra.mxu0 0
        %1148 = vmatpush.bf16.msra.mxu0 0
        %1149 = vmatpush.bf16.msra.mxu0 0
        %1150 = vmatpush.bf16.msra.mxu0 0
        %1151 = vmatpush.bf16.msra.mxu0 0
        %1152 = vmatpush.bf16.msra.mxu0 0
        %1153 = vmatpush.bf16.msra.mxu0 0
        %1154 = vmatpush.bf16.msra.mxu0 %v1145
        %1155 = vmatmul.bf16.gmra.mxu0 %v1142
        %v1156 = vpop.f32.mrf.mxu0
        %v1157 = vadd.f32 0.0, %v1156
        %v1158 = vpop.f32.mrf.mxu0
        %1159 = vdwg.mxu0
        %v1161 = vsel %vm944, %v1119, 0
        %v1164 = vsel %vm1124, %v940, 0
        %1166 = vmatpush.bf16.msra.mxu0 0
        %1167 = vmatpush.bf16.msra.mxu0 0
        %1168 = vmatpush.bf16.msra.mxu0 0
        %1169 = vmatpush.bf16.msra.mxu0 0
        %1170 = vmatpush.bf16.msra.mxu0 0
        %1171 = vmatpush.bf16.msra.mxu0 0
        %1172 = vmatpush.bf16.msra.mxu0 0
        %1173 = vmatpush.bf16.msra.mxu0 %v1164
        %1174 = vmatmul.bf16.gmra.mxu0 %v1161
        %v1175 = vpop.f32.mrf.mxu0
        %v1176 = vadd.f32 0.0, %v1175
        %v1177 = vpop.f32.mrf.mxu0
        %1178 = vdwg.mxu0
        %v1180 = vsel %vm944, %v1120, 0
        %v1183 = vsel %vm1124, %v943, 0
        %1185 = vmatpush.bf16.msra.mxu0 0
        %1186 = vmatpush.bf16.msra.mxu0 0
        %1187 = vmatpush.bf16.msra.mxu0 0
        %1188 = vmatpush.bf16.msra.mxu0 0
        %1189 = vmatpush.bf16.msra.mxu0 0
        %1190 = vmatpush.bf16.msra.mxu0 0
        %1191 = vmatpush.bf16.msra.mxu0 0
        %1192 = vmatpush.bf16.msra.mxu0 %v1183
        %1193 = vmatmul.bf16.gmra.mxu0 %v1180
        %v1194 = vpop.f32.mrf.mxu0
        %v1195 = vadd.f32 0.0, %v1194
        %v1196 = vpop.f32.mrf.mxu0
        %1197 = vdwg.mxu0
        %v1198 = vrot.slane %v1176, 4
        %vm1199 = vcmask 1047556
        %v1200 = vsel %vm1199, %v1198, %v1138
        %v1201 = vrot.slane %v1138, 4
        %v1202 = vsel %vm1199, %v1176, %v1201
        %v1204 = vunpack.c.l.s4 1983009808
        %v1205 = vunpack.c.0.s8 %v1204
        %v1206 = vperm.slane %v1200, %v1205
        %v1208 = vunpack.c.l.s4 1983009808
        %v1209 = vunpack.c.0.s8 %v1208
        %v1210 = vperm.slane %v1202, %v1209
        %v1211 = vrot.slane %v1195, 4
        %v1212 = vsel %vm1199, %v1211, %v1157
        %v1213 = vrot.slane %v1157, 4
        %v1214 = vsel %vm1199, %v1195, %v1213
        %v1216 = vunpack.c.l.s4 1983009808
        %v1217 = vunpack.c.0.s8 %v1216
        %v1218 = vperm.slane %v1212, %v1217
        %v1220 = vunpack.c.l.s4 1983009808
        %v1221 = vunpack.c.0.s8 %v1220
        %v1222 = vperm.slane %v1214, %v1221
        %v1223 = vrot.slane %v1218, 4
        %v1224 = vsel %vm1199, %v1223, %v1206
        %v1225 = vrot.slane %v1206, 4
        %v1226 = vsel %vm1199, %v1218, %v1225
        %v1228 = vunpack.c.l.s4 1934713408
        %v1229 = vunpack.c.0.s8 %v1228
        %v1230 = vperm.slane %v1224, %v1229
        %v1232 = vunpack.c.l.s4 1934713408
        %v1233 = vunpack.c.0.s8 %v1232
        %v1234 = vperm.slane %v1226, %v1233
        %v1235 = vrot.slane %v1222, 4
        %v1236 = vsel %vm1199, %v1235, %v1210
        %v1237 = vrot.slane %v1210, 4
        %v1238 = vsel %vm1199, %v1222, %v1237
        %v1240 = vunpack.c.l.s4 1934713408
        %v1241 = vunpack.c.0.s8 %v1240
        %v1242 = vperm.slane %v1236, %v1241
        %v1244 = vunpack.c.l.s4 1934713408
        %v1245 = vunpack.c.0.s8 %v1244
        %v1246 = vperm.slane %v1238, %v1245
        %v1247 = vrot.slane %v1230, 4
        %v1248 = vsel %vm1199, 0.0, %v1247
        %v1249 = vrot.slane %v1234, 4
        %v1250 = vsel %vm1199, 0.0, %v1249
        %v1251 = vrot.slane %v1242, 4
        %v1252 = vsel %vm1199, 0.0, %v1251
        %v1253 = vrot.slane %v1246, 4
        %v1254 = vsel %vm1199, 0.0, %v1253
        %v1255 = vsel %vm1199, %v1249, %v1230
        %v1257 = vunpack.c.l.s4 1983009808
        %v1258 = vunpack.c.0.s8 %v1257
        %v1259 = vperm.slane %v1255, %v1258
        %v1260 = vrot.slane %v1250, 4
        %v1261 = vsel %vm1199, %v1260, %v1248
        %v1263 = vunpack.c.l.s4 1983009808
        %v1264 = vunpack.c.0.s8 %v1263
        %v1265 = vperm.slane %v1261, %v1264
        %v1266 = vsel %vm1199, %v1253, %v1242
        %v1268 = vunpack.c.l.s4 1983009808
        %v1269 = vunpack.c.0.s8 %v1268
        %v1270 = vperm.slane %v1266, %v1269
        %v1271 = vrot.slane %v1254, 4
        %v1272 = vsel %vm1199, %v1271, %v1252
        %v1274 = vunpack.c.l.s4 1983009808
        %v1275 = vunpack.c.0.s8 %v1274
        %v1276 = vperm.slane %v1272, %v1275
        %v1277 = vrot.slane %v1265, 4
        %v1278 = vsel %vm1199, %v1277, %v1259
        %v1279 = vrot.slane %v1259, 4
        %v1280 = vsel %vm1199, %v1265, %v1279
        %v1282 = vunpack.c.l.s4 1934713408
        %v1283 = vunpack.c.0.s8 %v1282
        %v1284 = vperm.slane %v1278, %v1283
        %v1286 = vunpack.c.l.s4 1934713408
        %v1287 = vunpack.c.0.s8 %v1286
        %v1288 = vperm.slane %v1280, %v1287
        %v1289 = vrot.slane %v1276, 4
        %v1290 = vsel %vm1199, %v1289, %v1270
        %v1291 = vrot.slane %v1270, 4
        %v1292 = vsel %vm1199, %v1276, %v1291
        %v1294 = vunpack.c.l.s4 1934713408
        %v1295 = vunpack.c.0.s8 %v1294
        %v1296 = vperm.slane %v1290, %v1295
        %v1298 = vunpack.c.l.s4 1934713408
        %v1299 = vunpack.c.0.s8 %v1298
        %v1300 = vperm.slane %v1292, %v1299
        %v1301 = vrot.slane %v1296, 4
        %v1302 = vsel %vm1199, %v1301, %v1284
        %v1303 = vrot.slane %v1284, 4
        %v1304 = vsel %vm1199, %v1296, %v1303
        %v1305 = vrot.slane %v1300, 4
        %v1306 = vsel %vm1199, %v1305, %v1288
        %v1307 = vrot.slane %v1288, 4
        %v1308 = vsel %vm1199, %v1300, %v1307
        %1310 = vrot.lane.b32.xlu0 %v1304, 8
        %v1311 = vpop.permute.xlu0 %1310
        %1314 = vrot.lane.b32.xlu0 %v1306, 16
        %v1315 = vpop.permute.xlu0 %1314
        %1318 = vrot.lane.b32.xlu0 %v1308, 24
        %v1319 = vpop.permute.xlu0 %1318
        %v1321 = vsel %vm944, %v1302, %v1311
        %vm1322 = vcmask 130048
        %v1323 = vsel %vm1322, %v1321, %v1315
        %vm1324 = vcmask 195584
        %v1325 = vsel %vm1324, %v1323, %v1319
        %v1326 = vpack.c.bf16 %v1325, %v1325
        %v1327 = vperm.slane %v479, 4
        %v1332 = vunpack.c.l.b16 %v485
        %v1333 = vunpack.c.l.b16 %v486
        %v1334 = vunpack.c.l.b16 %v487
        %v1335 = vunpack.c.l.b16 %v488
        %v1336 = vpack.c.b16 %v1333, %v1332
        %v1337 = vpack.c.b16 %v1335, %v1334
        %v1341 = vsel %vm511, %v1326, 0
        %1343 = vmatpush.bf16.msra.mxu0 0
        %1344 = vmatpush.bf16.msra.mxu0 0
        %1345 = vmatpush.bf16.msra.mxu0 0
        %1346 = vmatpush.bf16.msra.mxu0 0
        %1347 = vmatpush.bf16.msra.mxu0 0
        %1348 = vmatpush.bf16.msra.mxu0 0
        %1349 = vmatpush.bf16.msra.mxu0 %v1337
        %1350 = vmatpush.bf16.msra.mxu0 %v1336
        %1351 = vmatmul.bf16.gmra.mxu0 %v1341
        %v1352 = vpop.f32.mrf.mxu0
        %v1353 = vadd.f32 %v1327, %v1352
        %v1354 = vpop.f32.mrf.mxu0
        %1355 = vdwg.mxu0
        %v1356 = vadd.f32 %v510, %v1353
        %p1357 = scmp.eq.s32.totalorder %s28, 1
        // Predicated region
        $region57: #{tpu_custom_call.1} parent=51 // pred_check
          %p1358 = pneg %p1357
        $region58: #{tpu_custom_call.1} parent=51 // pred_check_branch
          %1360 = sbr.rel (%p1358) target = $region60
        $region59: #{tpu_custom_call.1} parent=51 // pred_region
          %v1361 = vsel %vm944, %v1071, 0.0
          %v1362 = vsel %vm944, %v1086, 0.0
          %v1363 = vadd.f32 %v1361, %v1362
          %v1364 = vsel %vm944, %v1101, 0.0
          %v1365 = vadd.f32 %v1363, %v1364
          %v1366 = vsel %vm944, %v1116, 0.0
          %v1367 = vadd.f32 %v1365, %v1366
          %v1368 = vrcp.pop 4.0
          %v1369 = vmul.f32 4.0, %v1368
          %v1370 = vsub.f32 1.0, %v1369
          %v1371 = vmul.f32 %v1368, %v1370
          %v1372 = vadd.f32 %v1368, %v1371
          %vm1373 = vweird.f32 %v1368
          %v1374 = vsel %vm1373, %v1368, %v1372
          %v1375 = vmul.f32 %v1367, %v1374
          %1376 = vst.msk [vmem:[#allocation4] sm:$0xff] %vm944, %v1375
        $region60: #{tpu_custom_call.1} parent=51 // pred_fallthru
          _
        %v1377 = vsel %vm511, %v1356, 0.0
        %1378 = vadd.xlane.f32.xlu0 %v1377
        %v1379 = vpop.xlane.xlu0 %1378
        %v1380 = vmul.f32 %v1379, %v521
        %v1381 = vsub.f32 %v1356, %v1380
        %v1382 = vmul.f32 %v1381, %v1381
        %v1383 = vsel %vm511, %v1382, 0.0
        %1384 = vadd.xlane.f32.xlu0 %v1383
        %v1385 = vpop.xlane.xlu0 %1384
        %v1386 = vmul.f32 %v1385, %v521
        %v1387 = vadd.f32 %v1386, 1e-05
        %v1388 = vrsqrt.pop %v1387
        %v1389 = vmul.f32 %v1388, %v1387
        %v1390 = vmul.f32 %v1389, %v1388
        %v1391 = vmul.f32 0.5, %v1390
        %v1392 = vsub.f32 1.5, %v1391
        %v1393 = vmul.f32 %v1388, %v1392
        %vm1394 = vweird.f32 %v1387
        %vm1395 = vweird.f32 %v1388
        %vm1396 = vmor %vm1394, %vm1395
        %v1397 = vsel %vm1396, %v1388, %v1393
        %v1398 = vmul.f32 %v1381, %v1397
        %v1399 = vperm.slane %v479, 2
        %v1400 = vmul.f32 %v1398, %v1399
        %v1401 = vperm.slane %v479, 3
        %v1402 = vadd.f32 %v1400, %v1401
        %v1403 = vpack.c.bf16 %v1402, %v1402
        %v1405 = vperm.slane %v493, 0
        %v1411 = vunpack.c.l.b16 %v489
        %v1412 = vunpack.c.l.b16 %v490
        %v1413 = vunpack.c.l.b16 %v491
        %v1414 = vunpack.c.l.b16 %v492
        %v1415 = vpack.c.b16 %v1412, %v1411
        %v1416 = vpack.c.b16 %v1414, %v1413
        %v1420 = vsel %vm511, %v1403, 0
        %1422 = vmatpush.bf16.msra.mxu0 0
        %1423 = vmatpush.bf16.msra.mxu0 0
        %1424 = vmatpush.bf16.msra.mxu0 0
        %1425 = vmatpush.bf16.msra.mxu0 0
        %1426 = vmatpush.bf16.msra.mxu0 0
        %1427 = vmatpush.bf16.msra.mxu0 0
        %1428 = vmatpush.bf16.msra.mxu0 %v1416
        %1429 = vmatpush.bf16.msra.mxu0 %v1415
        %1430 = vmatmul.bf16.gmra.mxu0 %v1420
        %v1431 = vpop.f32.mrf.mxu0
        %v1432 = vadd.f32 %v1405, %v1431
        %v1433 = vpop.f32.mrf.mxu0
        %1434 = vdwg.mxu0
        %v1435 = vmul.f32 %v1432, 1.702
        %v1436 = vxor.u32 %v1435, 2147483648
        %v1437 = vmul.f32 %v1436, 1.442695
        %v1438 = vpow.pop %v1437
        %v1439 = vadd.f32 %v1438, 1.0
        %v1440 = vrcp.pop %v1439
        %v1441 = vmul.f32 %v1439, %v1440
        %v1442 = vsub.f32 1.0, %v1441
        %v1443 = vmul.f32 %v1440, %v1442
        %v1444 = vadd.f32 %v1440, %v1443
        %vm1445 = vweird.f32 %v1439
        %vm1446 = vweird.f32 %v1440
        %vm1447 = vmor %vm1445, %vm1446
        %v1448 = vsel %vm1447, %v1440, %v1444
        %v1449 = vand.u32 2147483647, %v1439
        %vm1450 = vcmp.eq.f32.partialorder %v1449, 8.507059e+37
        %v1451 = vand.u32 %v1439, 2147483648
        %v1452 = vor.u32 1.1754944e-38, %v1451
        %v1453 = vsel %vm1450, %v1452, %v1448
        %v1454 = vmul.f32 1.0, %v1453
        %v1455 = vmul.f32 %v1432, %v1454
        %v1456 = vpack.c.bf16 %v1455, %v1455
        %v1457 = vperm.slane %v479, 5
        %v1474 = vunpack.c.l.b16 %v494
        %v1475 = vunpack.c.l.b16 %v495
        %v1476 = vunpack.c.l.b16 %v496
        %v1477 = vunpack.c.l.b16 %v497
        %v1478 = vunpack.c.l.b16 %v498
        %v1479 = vunpack.c.l.b16 %v499
        %v1480 = vunpack.c.l.b16 %v500
        %v1481 = vunpack.c.l.b16 %v501
        %v1482 = vunpack.c.l.b16 %v502
        %v1483 = vunpack.c.l.b16 %v503
        %v1484 = vunpack.c.l.b16 %v504
        %v1485 = vunpack.c.l.b16 %v505
        %v1486 = vunpack.c.l.b16 %v506
        %v1487 = vunpack.c.l.b16 %v507
        %v1488 = vunpack.c.l.b16 %v508
        %v1489 = vunpack.c.l.b16 %v509
        %v1490 = vpack.c.b16 %v1475, %v1474
        %v1491 = vpack.c.b16 %v1477, %v1476
        %v1492 = vpack.c.b16 %v1479, %v1478
        %v1493 = vpack.c.b16 %v1481, %v1480
        %v1494 = vpack.c.b16 %v1483, %v1482
        %v1495 = vpack.c.b16 %v1485, %v1484
        %v1496 = vpack.c.b16 %v1487, %v1486
        %v1497 = vpack.c.b16 %v1489, %v1488
        %1506 = vmatpush.bf16.msra.mxu0 %v1497
        %1507 = vmatpush.bf16.msra.mxu0 %v1496
        %1508 = vmatpush.bf16.msra.mxu0 %v1495
        %1509 = vmatpush.bf16.msra.mxu0 %v1494
        %1510 = vmatpush.bf16.msra.mxu0 %v1493
        %1511 = vmatpush.bf16.msra.mxu0 %v1492
        %1512 = vmatpush.bf16.msra.mxu0 %v1491
        %1513 = vmatpush.bf16.msra.mxu0 %v1490
        %1514 = vmatmul.bf16.gmra.mxu0 %v1456
        %v1515 = vpop.f32.mrf.mxu0
        %v1516 = vadd.f32 %v1457, %v1515
        %v1517 = vpop.f32.mrf.mxu0
        %1518 = vdwg.mxu0
        %v1519 = vadd.f32 %v1356, %v1516
        %1520 = vst.msk [vmem:[#allocation2] sm:$0xff] %vm511, %v1519
        %s1521 = scalar_lea.vmem [#allocation2], 8
        %v1522 = vld [vmem:[%s1521] sm:$0xff]
        %v1523 = vsel %vm511, %v1522, 0.0
        %1524 = vadd.xlane.f32.xlu0 %v1523
        %v1525 = vpop.xlane.xlu0 %1524
        %v1526 = vmul.f32 %v1525, %v521
        %v1527 = vsub.f32 %v1522, %v1526
        %v1528 = vmul.f32 %v1527, %v1527
        %v1529 = vsel %vm511, %v1528, 0.0
        %1530 = vadd.xlane.f32.xlu0 %v1529
        %v1531 = vpop.xlane.xlu0 %1530
        %v1532 = vmul.f32 %v1531, %v521
        %v1533 = vadd.f32 %v1532, 1e-05
        %v1534 = vrsqrt.pop %v1533
        %v1535 = vmul.f32 %v1534, %v1533
        %v1536 = vmul.f32 %v1535, %v1534
        %v1537 = vmul.f32 0.5, %v1536
        %v1538 = vsub.f32 1.5, %v1537
        %v1539 = vmul.f32 %v1534, %v1538
        %vm1540 = vweird.f32 %v1533
        %vm1541 = vweird.f32 %v1534
        %vm1542 = vmor %vm1540, %vm1541
        %v1543 = vsel %vm1542, %v1534, %v1539
        %v1544 = vmul.f32 %v1527, %v1543
        %v1545 = vmul.f32 %v1544, %v541
        %v1546 = vadd.f32 %v1545, %v543
        %v1547 = vpack.c.bf16 %v1546, %v1546
        %v1549 = vsel %vm511, %v1547, 0
        %1551 = vmatpush.bf16.msra.mxu0 0
        %1552 = vmatpush.bf16.msra.mxu0 0
        %1553 = vmatpush.bf16.msra.mxu0 0
        %1554 = vmatpush.bf16.msra.mxu0 0
        %1555 = vmatpush.bf16.msra.mxu0 0
        %1556 = vmatpush.bf16.msra.mxu0 0
        %1557 = vmatpush.bf16.msra.mxu0 %v558
        %1558 = vmatpush.bf16.msra.mxu0 %v557
        %1559 = vmatmul.bf16.gmra.mxu0 %v1549
        %v1560 = vpop.f32.mrf.mxu0
        %v1561 = vadd.f32 %v547, %v1560
        %v1562 = vpop.f32.mrf.mxu0
        %1563 = vdwg.mxu0
        %v1564 = vpack.c.bf16 %v1561, %v1561
        %1566 = vrot.lane.b32.xlu0 %v1564, 120
        %v1567 = vpop.permute.xlu0 %1566
        %1568 = vrot.lane.b32.xlu0 %v1564, 112
        %v1569 = vpop.permute.xlu0 %1568
        %1570 = vrot.lane.b32.xlu0 %v1564, 104
        %v1571 = vpop.permute.xlu0 %1570
        %v1574 = vpack.i.b16 %v1567, %v1564
        %v1575 = vshrl.u32 %v1564, 16
        %v1576 = vshrl.u32 %v1567, 16
        %v1577 = vpack.i.b16 %v1576, %v1575
        %v1580 = vpack.i.b16 %v1571, %v1569
        %v1581 = vshrl.u32 %v1569, 16
        %v1582 = vshrl.u32 %v1571, 16
        %v1583 = vpack.i.b16 %v1582, %v1581
        %v1586 = vunpack.c.l.s4 1983009808
        %v1587 = vunpack.c.0.s8 %v1586
        %v1588 = vperm.slane %v1574, %v1587
        %v1591 = vunpack.c.l.s4 1983009808
        %v1592 = vunpack.c.0.s8 %v1591
        %v1593 = vperm.slane %v1580, %v1592
        %v1594 = vrot.slane %v1593, 4
        %v1595 = vsel %vm608, %v1594, %v1588
        %v1596 = vrot.slane %v1588, 4
        %v1597 = vsel %vm608, %v1593, %v1596
        %v1599 = vunpack.c.l.s4 1934713408
        %v1600 = vunpack.c.0.s8 %v1599
        %v1601 = vperm.slane %v1595, %v1600
        %v1603 = vunpack.c.l.s4 1934713408
        %v1604 = vunpack.c.0.s8 %v1603
        %v1605 = vperm.slane %v1597, %v1604
        %v1606 = vrot.slane %v1601, 4
        %v1607 = vsel %vm608, 0, %v1606
        %v1608 = vrot.slane %v1605, 4
        %v1609 = vsel %vm608, 0, %v1608
        %v1612 = vunpack.c.l.s4 1983009808
        %v1613 = vunpack.c.0.s8 %v1612
        %v1614 = vperm.slane %v1577, %v1613
        %v1617 = vunpack.c.l.s4 1983009808
        %v1618 = vunpack.c.0.s8 %v1617
        %v1619 = vperm.slane %v1583, %v1618
        %v1620 = vrot.slane %v1619, 4
        %v1621 = vsel %vm608, %v1620, %v1614
        %v1622 = vrot.slane %v1614, 4
        %v1623 = vsel %vm608, %v1619, %v1622
        %v1625 = vunpack.c.l.s4 1934713408
        %v1626 = vunpack.c.0.s8 %v1625
        %v1627 = vperm.slane %v1621, %v1626
        %v1629 = vunpack.c.l.s4 1934713408
        %v1630 = vunpack.c.0.s8 %v1629
        %v1631 = vperm.slane %v1623, %v1630
        %v1632 = vrot.slane %v1627, 4
        %v1633 = vsel %vm608, 0, %v1632
        %v1634 = vrot.slane %v1631, 4
        %v1635 = vsel %vm608, 0, %v1634
        %v1636 = vsel %vm608, %v1608, %v1601
        %v1638 = vunpack.c.l.s4 1983009808
        %v1639 = vunpack.c.0.s8 %v1638
        %v1640 = vperm.slane %v1636, %v1639
        %v1641 = vrot.slane %v1609, 4
        %v1642 = vsel %vm608, %v1641, %v1607
        %v1644 = vunpack.c.l.s4 1983009808
        %v1645 = vunpack.c.0.s8 %v1644
        %v1646 = vperm.slane %v1642, %v1645
        %v1647 = vrot.slane %v1646, 4
        %v1648 = vsel %vm608, %v1647, %v1640
        %v1650 = vunpack.c.l.s4 1934713408
        %v1651 = vunpack.c.0.s8 %v1650
        %v1652 = vperm.slane %v1648, %v1651
        %v1653 = vrot.slane %v1652, 4
        %v1654 = vsel %vm608, 0, %v1653
        %v1655 = vsel %vm608, %v1634, %v1627
        %v1657 = vunpack.c.l.s4 1983009808
        %v1658 = vunpack.c.0.s8 %v1657
        %v1659 = vperm.slane %v1655, %v1658
        %v1660 = vrot.slane %v1635, 4
        %v1661 = vsel %vm608, %v1660, %v1633
        %v1663 = vunpack.c.l.s4 1983009808
        %v1664 = vunpack.c.0.s8 %v1663
        %v1665 = vperm.slane %v1661, %v1664
        %v1666 = vrot.slane %v1665, 4
        %v1667 = vsel %vm608, %v1666, %v1659
        %v1669 = vunpack.c.l.s4 1934713408
        %v1670 = vunpack.c.0.s8 %v1669
        %v1671 = vperm.slane %v1667, %v1670
        %v1672 = vrot.slane %v1671, 4
        %v1673 = vsel %vm608, 0, %v1672
        %v1676 = vpack.i.b16 %v1671, %v1652
        %v1677 = vshrl.u32 %v1652, 16
        %v1678 = vshrl.u32 %v1671, 16
        %v1679 = vpack.i.b16 %v1678, %v1677
        %v1682 = vpack.i.b16 %v1673, %v1654
        %v1683 = vshrl.u32 %v1654, 16
        %v1684 = vshrl.u32 %v1673, 16
        %v1685 = vpack.i.b16 %v1684, %v1683
        %1686 = vrot.lane.b32.xlu0 %v1564, 96
        %v1687 = vpop.permute.xlu0 %1686
        %1688 = vrot.lane.b32.xlu0 %v1567, 96
        %v1689 = vpop.permute.xlu0 %1688
        %1690 = vrot.lane.b32.xlu0 %v1569, 96
        %v1691 = vpop.permute.xlu0 %1690
        %1692 = vrot.lane.b32.xlu0 %v1571, 96
        %v1693 = vpop.permute.xlu0 %1692
        %v1696 = vpack.i.b16 %v1689, %v1687
        %v1697 = vshrl.u32 %v1687, 16
        %v1698 = vshrl.u32 %v1689, 16
        %v1699 = vpack.i.b16 %v1698, %v1697
        %v1702 = vpack.i.b16 %v1693, %v1691
        %v1703 = vshrl.u32 %v1691, 16
        %v1704 = vshrl.u32 %v1693, 16
        %v1705 = vpack.i.b16 %v1704, %v1703
        %v1708 = vunpack.c.l.s4 1983009808
        %v1709 = vunpack.c.0.s8 %v1708
        %v1710 = vperm.slane %v1696, %v1709
        %v1713 = vunpack.c.l.s4 1983009808
        %v1714 = vunpack.c.0.s8 %v1713
        %v1715 = vperm.slane %v1702, %v1714
        %v1716 = vrot.slane %v1715, 4
        %v1717 = vsel %vm608, %v1716, %v1710
        %v1718 = vrot.slane %v1710, 4
        %v1719 = vsel %vm608, %v1715, %v1718
        %v1721 = vunpack.c.l.s4 1934713408
        %v1722 = vunpack.c.0.s8 %v1721
        %v1723 = vperm.slane %v1717, %v1722
        %v1725 = vunpack.c.l.s4 1934713408
        %v1726 = vunpack.c.0.s8 %v1725
        %v1727 = vperm.slane %v1719, %v1726
        %v1728 = vrot.slane %v1723, 4
        %v1729 = vsel %vm608, 0, %v1728
        %v1730 = vrot.slane %v1727, 4
        %v1731 = vsel %vm608, 0, %v1730
        %v1734 = vunpack.c.l.s4 1983009808
        %v1735 = vunpack.c.0.s8 %v1734
        %v1736 = vperm.slane %v1699, %v1735
        %v1739 = vunpack.c.l.s4 1983009808
        %v1740 = vunpack.c.0.s8 %v1739
        %v1741 = vperm.slane %v1705, %v1740
        %v1742 = vrot.slane %v1741, 4
        %v1743 = vsel %vm608, %v1742, %v1736
        %v1744 = vrot.slane %v1736, 4
        %v1745 = vsel %vm608, %v1741, %v1744
        %v1747 = vunpack.c.l.s4 1934713408
        %v1748 = vunpack.c.0.s8 %v1747
        %v1749 = vperm.slane %v1743, %v1748
        %v1751 = vunpack.c.l.s4 1934713408
        %v1752 = vunpack.c.0.s8 %v1751
        %v1753 = vperm.slane %v1745, %v1752
        %v1754 = vrot.slane %v1749, 4
        %v1755 = vsel %vm608, 0, %v1754
        %v1756 = vrot.slane %v1753, 4
        %v1757 = vsel %vm608, 0, %v1756
        %v1758 = vsel %vm608, %v1730, %v1723
        %v1760 = vunpack.c.l.s4 1983009808
        %v1761 = vunpack.c.0.s8 %v1760
        %v1762 = vperm.slane %v1758, %v1761
        %v1763 = vrot.slane %v1731, 4
        %v1764 = vsel %vm608, %v1763, %v1729
        %v1766 = vunpack.c.l.s4 1983009808
        %v1767 = vunpack.c.0.s8 %v1766
        %v1768 = vperm.slane %v1764, %v1767
        %v1769 = vrot.slane %v1768, 4
        %v1770 = vsel %vm608, %v1769, %v1762
        %v1772 = vunpack.c.l.s4 1934713408
        %v1773 = vunpack.c.0.s8 %v1772
        %v1774 = vperm.slane %v1770, %v1773
        %v1775 = vrot.slane %v1774, 4
        %v1776 = vsel %vm608, 0, %v1775
        %v1777 = vsel %vm608, %v1756, %v1749
        %v1779 = vunpack.c.l.s4 1983009808
        %v1780 = vunpack.c.0.s8 %v1779
        %v1781 = vperm.slane %v1777, %v1780
        %v1782 = vrot.slane %v1757, 4
        %v1783 = vsel %vm608, %v1782, %v1755
        %v1785 = vunpack.c.l.s4 1983009808
        %v1786 = vunpack.c.0.s8 %v1785
        %v1787 = vperm.slane %v1783, %v1786
        %v1788 = vrot.slane %v1787, 4
        %v1789 = vsel %vm608, %v1788, %v1781
        %v1791 = vunpack.c.l.s4 1934713408
        %v1792 = vunpack.c.0.s8 %v1791
        %v1793 = vperm.slane %v1789, %v1792
        %v1794 = vrot.slane %v1793, 4
        %v1795 = vsel %vm608, 0, %v1794
        %v1798 = vpack.i.b16 %v1793, %v1774
        %v1799 = vshrl.u32 %v1774, 16
        %v1800 = vshrl.u32 %v1793, 16
        %v1801 = vpack.i.b16 %v1800, %v1799
        %v1804 = vpack.i.b16 %v1795, %v1776
        %v1805 = vshrl.u32 %v1776, 16
        %v1806 = vshrl.u32 %v1795, 16
        %v1807 = vpack.i.b16 %v1806, %v1805
        %1808 = vrot.lane.b32.xlu0 %v1564, 64
        %v1809 = vpop.permute.xlu0 %1808
        %1810 = vrot.lane.b32.xlu0 %v1567, 64
        %v1811 = vpop.permute.xlu0 %1810
        %1812 = vrot.lane.b32.xlu0 %v1569, 64
        %v1813 = vpop.permute.xlu0 %1812
        %1814 = vrot.lane.b32.xlu0 %v1571, 64
        %v1815 = vpop.permute.xlu0 %1814
        %v1818 = vpack.i.b16 %v1811, %v1809
        %v1819 = vshrl.u32 %v1809, 16
        %v1820 = vshrl.u32 %v1811, 16
        %v1821 = vpack.i.b16 %v1820, %v1819
        %v1824 = vpack.i.b16 %v1815, %v1813
        %v1825 = vshrl.u32 %v1813, 16
        %v1826 = vshrl.u32 %v1815, 16
        %v1827 = vpack.i.b16 %v1826, %v1825
        %v1830 = vunpack.c.l.s4 1983009808
        %v1831 = vunpack.c.0.s8 %v1830
        %v1832 = vperm.slane %v1818, %v1831
        %v1835 = vunpack.c.l.s4 1983009808
        %v1836 = vunpack.c.0.s8 %v1835
        %v1837 = vperm.slane %v1824, %v1836
        %v1838 = vrot.slane %v1837, 4
        %v1839 = vsel %vm608, %v1838, %v1832
        %v1840 = vrot.slane %v1832, 4
        %v1841 = vsel %vm608, %v1837, %v1840
        %v1843 = vunpack.c.l.s4 1934713408
        %v1844 = vunpack.c.0.s8 %v1843
        %v1845 = vperm.slane %v1839, %v1844
        %v1847 = vunpack.c.l.s4 1934713408
        %v1848 = vunpack.c.0.s8 %v1847
        %v1849 = vperm.slane %v1841, %v1848
        %v1850 = vrot.slane %v1845, 4
        %v1851 = vsel %vm608, 0, %v1850
        %v1852 = vrot.slane %v1849, 4
        %v1853 = vsel %vm608, 0, %v1852
        %v1856 = vunpack.c.l.s4 1983009808
        %v1857 = vunpack.c.0.s8 %v1856
        %v1858 = vperm.slane %v1821, %v1857
        %v1861 = vunpack.c.l.s4 1983009808
        %v1862 = vunpack.c.0.s8 %v1861
        %v1863 = vperm.slane %v1827, %v1862
        %v1864 = vrot.slane %v1863, 4
        %v1865 = vsel %vm608, %v1864, %v1858
        %v1866 = vrot.slane %v1858, 4
        %v1867 = vsel %vm608, %v1863, %v1866
        %v1869 = vunpack.c.l.s4 1934713408
        %v1870 = vunpack.c.0.s8 %v1869
        %v1871 = vperm.slane %v1865, %v1870
        %v1873 = vunpack.c.l.s4 1934713408
        %v1874 = vunpack.c.0.s8 %v1873
        %v1875 = vperm.slane %v1867, %v1874
        %v1876 = vrot.slane %v1871, 4
        %v1877 = vsel %vm608, 0, %v1876
        %v1878 = vrot.slane %v1875, 4
        %v1879 = vsel %vm608, 0, %v1878
        %v1880 = vsel %vm608, %v1852, %v1845
        %v1882 = vunpack.c.l.s4 1983009808
        %v1883 = vunpack.c.0.s8 %v1882
        %v1884 = vperm.slane %v1880, %v1883
        %v1885 = vrot.slane %v1853, 4
        %v1886 = vsel %vm608, %v1885, %v1851
        %v1888 = vunpack.c.l.s4 1983009808
        %v1889 = vunpack.c.0.s8 %v1888
        %v1890 = vperm.slane %v1886, %v1889
        %v1891 = vrot.slane %v1890, 4
        %v1892 = vsel %vm608, %v1891, %v1884
        %v1894 = vunpack.c.l.s4 1934713408
        %v1895 = vunpack.c.0.s8 %v1894
        %v1896 = vperm.slane %v1892, %v1895
        %v1897 = vrot.slane %v1896, 4
        %v1898 = vsel %vm608, 0, %v1897
        %v1899 = vsel %vm608, %v1878, %v1871
        %v1901 = vunpack.c.l.s4 1983009808
        %v1902 = vunpack.c.0.s8 %v1901
        %v1903 = vperm.slane %v1899, %v1902
        %v1904 = vrot.slane %v1879, 4
        %v1905 = vsel %vm608, %v1904, %v1877
        %v1907 = vunpack.c.l.s4 1983009808
        %v1908 = vunpack.c.0.s8 %v1907
        %v1909 = vperm.slane %v1905, %v1908
        %v1910 = vrot.slane %v1909, 4
        %v1911 = vsel %vm608, %v1910, %v1903
        %v1913 = vunpack.c.l.s4 1934713408
        %v1914 = vunpack.c.0.s8 %v1913
        %v1915 = vperm.slane %v1911, %v1914
        %v1916 = vrot.slane %v1915, 4
        %v1917 = vsel %vm608, 0, %v1916
        %v1920 = vpack.i.b16 %v1915, %v1896
        %v1921 = vshrl.u32 %v1896, 16
        %v1922 = vshrl.u32 %v1915, 16
        %v1923 = vpack.i.b16 %v1922, %v1921
        %v1926 = vpack.i.b16 %v1917, %v1898
        %v1927 = vshrl.u32 %v1898, 16
        %v1928 = vshrl.u32 %v1917, 16
        %v1929 = vpack.i.b16 %v1928, %v1927
        %v1931 = vsel %vm944, %v1676, 0
        %v1934 = vsel %vm944, %v1798, 0
        %1936 = vmatpush.bf16.xpose.msra.mxu0 0
        %1937 = vmatpush.bf16.xpose.msra.mxu0 0
        %1938 = vmatpush.bf16.xpose.msra.mxu0 0
        %1939 = vmatpush.bf16.xpose.msra.mxu0 0
        %1940 = vmatpush.bf16.xpose.msra.mxu0 0
        %1941 = vmatpush.bf16.xpose.msra.mxu0 0
        %1942 = vmatpush.bf16.xpose.msra.mxu0 0
        %1943 = vmatpush.bf16.xpose.msra.mxu0 %v1934
        %1944 = vmatmul.bf16.gmra.mxu0 %v1931
        %v1945 = vpop.f32.mrf.mxu0
        %v1946 = vadd.f32 0.0, %v1945
        %v1947 = vpop.f32.mrf.mxu0
        %1948 = vdwg.mxu0
        %v1950 = vsel %vm944, %v1679, 0
        %v1953 = vsel %vm944, %v1801, 0
        %1955 = vmatpush.bf16.xpose.msra.mxu0 0
        %1956 = vmatpush.bf16.xpose.msra.mxu0 0
        %1957 = vmatpush.bf16.xpose.msra.mxu0 0
        %1958 = vmatpush.bf16.xpose.msra.mxu0 0
        %1959 = vmatpush.bf16.xpose.msra.mxu0 0
        %1960 = vmatpush.bf16.xpose.msra.mxu0 0
        %1961 = vmatpush.bf16.xpose.msra.mxu0 0
        %1962 = vmatpush.bf16.xpose.msra.mxu0 %v1953
        %1963 = vmatmul.bf16.gmra.mxu0 %v1950
        %v1964 = vpop.f32.mrf.mxu0
        %v1965 = vadd.f32 0.0, %v1964
        %v1966 = vpop.f32.mrf.mxu0
        %1967 = vdwg.mxu0
        %v1969 = vsel %vm944, %v1682, 0
        %v1972 = vsel %vm944, %v1804, 0
        %1974 = vmatpush.bf16.xpose.msra.mxu0 0
        %1975 = vmatpush.bf16.xpose.msra.mxu0 0
        %1976 = vmatpush.bf16.xpose.msra.mxu0 0
        %1977 = vmatpush.bf16.xpose.msra.mxu0 0
        %1978 = vmatpush.bf16.xpose.msra.mxu0 0
        %1979 = vmatpush.bf16.xpose.msra.mxu0 0
        %1980 = vmatpush.bf16.xpose.msra.mxu0 0
        %1981 = vmatpush.bf16.xpose.msra.mxu0 %v1972
        %1982 = vmatmul.bf16.gmra.mxu0 %v1969
        %v1983 = vpop.f32.mrf.mxu0
        %v1984 = vadd.f32 0.0, %v1983
        %v1985 = vpop.f32.mrf.mxu0
        %1986 = vdwg.mxu0
        %v1988 = vsel %vm944, %v1685, 0
        %v1991 = vsel %vm944, %v1807, 0
        %1993 = vmatpush.bf16.xpose.msra.mxu0 0
        %1994 = vmatpush.bf16.xpose.msra.mxu0 0
        %1995 = vmatpush.bf16.xpose.msra.mxu0 0
        %1996 = vmatpush.bf16.xpose.msra.mxu0 0
        %1997 = vmatpush.bf16.xpose.msra.mxu0 0
        %1998 = vmatpush.bf16.xpose.msra.mxu0 0
        %1999 = vmatpush.bf16.xpose.msra.mxu0 0
        %2000 = vmatpush.bf16.xpose.msra.mxu0 %v1991
        %2001 = vmatmul.bf16.gmra.mxu0 %v1988
        %v2002 = vpop.f32.mrf.mxu0
        %v2003 = vadd.f32 0.0, %v2002
        %v2004 = vpop.f32.mrf.mxu0
        %2005 = vdwg.mxu0
        %v2006 = vsel %vm944, %v1946, -inf
        %2007 = vmax.xlane.f32.xlu0 %v2006
        %v2008 = vpop.xlane.xlu0 %2007
        %v2009 = vsel %vm944, %v1965, -inf
        %2010 = vmax.xlane.f32.xlu0 %v2009
        %v2011 = vpop.xlane.xlu0 %2010
        %v2012 = vsel %vm944, %v1984, -inf
        %2013 = vmax.xlane.f32.xlu0 %v2012
        %v2014 = vpop.xlane.xlu0 %2013
        %v2015 = vsel %vm944, %v2003, -inf
        %2016 = vmax.xlane.f32.xlu0 %v2015
        %v2017 = vpop.xlane.xlu0 %2016
        %v2018 = vsub.f32 %v1946, %v2008
        %v2019 = vsub.f32 %v1965, %v2011
        %v2020 = vsub.f32 %v1984, %v2014
        %v2021 = vsub.f32 %v2003, %v2017
        %v2022 = vmul.f32 %v2018, 1.442695
        %v2023 = vpow.pop %v2022
        %v2024 = vmul.f32 %v2019, 1.442695
        %v2025 = vpow.pop %v2024
        %v2026 = vmul.f32 %v2020, 1.442695
        %v2027 = vpow.pop %v2026
        %v2028 = vmul.f32 %v2021, 1.442695
        %v2029 = vpow.pop %v2028
        %v2030 = vsel %vm944, %v2023, 0.0
        %2031 = vadd.xlane.f32.xlu0 %v2030
        %v2032 = vpop.xlane.xlu0 %2031
        %v2033 = vsel %vm944, %v2025, 0.0
        %2034 = vadd.xlane.f32.xlu0 %v2033
        %v2035 = vpop.xlane.xlu0 %2034
        %v2036 = vsel %vm944, %v2027, 0.0
        %2037 = vadd.xlane.f32.xlu0 %v2036
        %v2038 = vpop.xlane.xlu0 %2037
        %v2039 = vsel %vm944, %v2029, 0.0
        %2040 = vadd.xlane.f32.xlu0 %v2039
        %v2041 = vpop.xlane.xlu0 %2040
        %v2042 = vrcp.pop %v2032
        %v2043 = vmul.f32 %v2032, %v2042
        %v2044 = vsub.f32 1.0, %v2043
        %v2045 = vmul.f32 %v2042, %v2044
        %v2046 = vadd.f32 %v2042, %v2045
        %vm2047 = vweird.f32 %v2032
        %vm2048 = vweird.f32 %v2042
        %vm2049 = vmor %vm2047, %vm2048
        %v2050 = vsel %vm2049, %v2042, %v2046
        %v2051 = vand.u32 2147483647, %v2032
        %vm2052 = vcmp.eq.f32.partialorder %v2051, 8.507059e+37
        %v2053 = vand.u32 %v2032, 2147483648
        %v2054 = vor.u32 1.1754944e-38, %v2053
        %v2055 = vsel %vm2052, %v2054, %v2050
        %v2056 = vmul.f32 %v2023, %v2055
        %v2057 = vrcp.pop %v2035
        %v2058 = vmul.f32 %v2035, %v2057
        %v2059 = vsub.f32 1.0, %v2058
        %v2060 = vmul.f32 %v2057, %v2059
        %v2061 = vadd.f32 %v2057, %v2060
        %vm2062 = vweird.f32 %v2035
        %vm2063 = vweird.f32 %v2057
        %vm2064 = vmor %vm2062, %vm2063
        %v2065 = vsel %vm2064, %v2057, %v2061
        %v2066 = vand.u32 2147483647, %v2035
        %vm2067 = vcmp.eq.f32.partialorder %v2066, 8.507059e+37
        %v2068 = vand.u32 %v2035, 2147483648
        %v2069 = vor.u32 1.1754944e-38, %v2068
        %v2070 = vsel %vm2067, %v2069, %v2065
        %v2071 = vmul.f32 %v2025, %v2070
        %v2072 = vrcp.pop %v2038
        %v2073 = vmul.f32 %v2038, %v2072
        %v2074 = vsub.f32 1.0, %v2073
        %v2075 = vmul.f32 %v2072, %v2074
        %v2076 = vadd.f32 %v2072, %v2075
        %vm2077 = vweird.f32 %v2038
        %vm2078 = vweird.f32 %v2072
        %vm2079 = vmor %vm2077, %vm2078
        %v2080 = vsel %vm2079, %v2072, %v2076
        %v2081 = vand.u32 2147483647, %v2038
        %vm2082 = vcmp.eq.f32.partialorder %v2081, 8.507059e+37
        %v2083 = vand.u32 %v2038, 2147483648
        %v2084 = vor.u32 1.1754944e-38, %v2083
        %v2085 = vsel %vm2082, %v2084, %v2080
        %v2086 = vmul.f32 %v2027, %v2085
        %v2087 = vrcp.pop %v2041
        %v2088 = vmul.f32 %v2041, %v2087
        %v2089 = vsub.f32 1.0, %v2088
        %v2090 = vmul.f32 %v2087, %v2089
        %v2091 = vadd.f32 %v2087, %v2090
        %vm2092 = vweird.f32 %v2041
        %vm2093 = vweird.f32 %v2087
        %vm2094 = vmor %vm2092, %vm2093
        %v2095 = vsel %vm2094, %v2087, %v2091
        %v2096 = vand.u32 2147483647, %v2041
        %vm2097 = vcmp.eq.f32.partialorder %v2096, 8.507059e+37
        %v2098 = vand.u32 %v2041, 2147483648
        %v2099 = vor.u32 1.1754944e-38, %v2098
        %v2100 = vsel %vm2097, %v2099, %v2095
        %v2101 = vmul.f32 %v2029, %v2100
        %v2102 = vpack.c.bf16 %v2056, %v2056
        %v2103 = vpack.c.bf16 %v2071, %v2071
        %v2104 = vpack.c.bf16 %v2086, %v2086
        %v2105 = vpack.c.bf16 %v2101, %v2101
        %v2107 = vsel %vm944, %v2102, 0
        %v2110 = vsel %vm1124, %v1920, 0
        %2112 = vmatpush.bf16.msra.mxu0 0
        %2113 = vmatpush.bf16.msra.mxu0 0
        %2114 = vmatpush.bf16.msra.mxu0 0
        %2115 = vmatpush.bf16.msra.mxu0 0
        %2116 = vmatpush.bf16.msra.mxu0 0
        %2117 = vmatpush.bf16.msra.mxu0 0
        %2118 = vmatpush.bf16.msra.mxu0 0
        %2119 = vmatpush.bf16.msra.mxu0 %v2110
        %2120 = vmatmul.bf16.gmra.mxu0 %v2107
        %v2121 = vpop.f32.mrf.mxu0
        %v2122 = vadd.f32 0.0, %v2121
        %v2123 = vpop.f32.mrf.mxu0
        %2124 = vdwg.mxu0
        %v2126 = vsel %vm944, %v2103, 0
        %v2129 = vsel %vm1124, %v1923, 0
        %2131 = vmatpush.bf16.msra.mxu0 0
        %2132 = vmatpush.bf16.msra.mxu0 0
        %2133 = vmatpush.bf16.msra.mxu0 0
        %2134 = vmatpush.bf16.msra.mxu0 0
        %2135 = vmatpush.bf16.msra.mxu0 0
        %2136 = vmatpush.bf16.msra.mxu0 0
        %2137 = vmatpush.bf16.msra.mxu0 0
        %2138 = vmatpush.bf16.msra.mxu0 %v2129
        %2139 = vmatmul.bf16.gmra.mxu0 %v2126
        %v2140 = vpop.f32.mrf.mxu0
        %v2141 = vadd.f32 0.0, %v2140
        %v2142 = vpop.f32.mrf.mxu0
        %2143 = vdwg.mxu0
        %v2145 = vsel %vm944, %v2104, 0
        %v2148 = vsel %vm1124, %v1926, 0
        %2150 = vmatpush.bf16.msra.mxu0 0
        %2151 = vmatpush.bf16.msra.mxu0 0
        %2152 = vmatpush.bf16.msra.mxu0 0
        %2153 = vmatpush.bf16.msra.mxu0 0
        %2154 = vmatpush.bf16.msra.mxu0 0
        %2155 = vmatpush.bf16.msra.mxu0 0
        %2156 = vmatpush.bf16.msra.mxu0 0
        %2157 = vmatpush.bf16.msra.mxu0 %v2148
        %2158 = vmatmul.bf16.gmra.mxu0 %v2145
        %v2159 = vpop.f32.mrf.mxu0
        %v2160 = vadd.f32 0.0, %v2159
        %v2161 = vpop.f32.mrf.mxu0
        %2162 = vdwg.mxu0
        %v2164 = vsel %vm944, %v2105, 0
        %v2167 = vsel %vm1124, %v1929, 0
        %2169 = vmatpush.bf16.msra.mxu0 0
        %2170 = vmatpush.bf16.msra.mxu0 0
        %2171 = vmatpush.bf16.msra.mxu0 0
        %2172 = vmatpush.bf16.msra.mxu0 0
        %2173 = vmatpush.bf16.msra.mxu0 0
        %2174 = vmatpush.bf16.msra.mxu0 0
        %2175 = vmatpush.bf16.msra.mxu0 0
        %2176 = vmatpush.bf16.msra.mxu0 %v2167
        %2177 = vmatmul.bf16.gmra.mxu0 %v2164
        %v2178 = vpop.f32.mrf.mxu0
        %v2179 = vadd.f32 0.0, %v2178
        %v2180 = vpop.f32.mrf.mxu0
        %2181 = vdwg.mxu0
        %v2182 = vrot.slane %v2160, 4
        %v2183 = vsel %vm1199, %v2182, %v2122
        %v2184 = vrot.slane %v2122, 4
        %v2185 = vsel %vm1199, %v2160, %v2184
        %v2187 = vunpack.c.l.s4 1983009808
        %v2188 = vunpack.c.0.s8 %v2187
        %v2189 = vperm.slane %v2183, %v2188
        %v2191 = vunpack.c.l.s4 1983009808
        %v2192 = vunpack.c.0.s8 %v2191
        %v2193 = vperm.slane %v2185, %v2192
        %v2194 = vrot.slane %v2179, 4
        %v2195 = vsel %vm1199, %v2194, %v2141
        %v2196 = vrot.slane %v2141, 4
        %v2197 = vsel %vm1199, %v2179, %v2196
        %v2199 = vunpack.c.l.s4 1983009808
        %v2200 = vunpack.c.0.s8 %v2199
        %v2201 = vperm.slane %v2195, %v2200
        %v2203 = vunpack.c.l.s4 1983009808
        %v2204 = vunpack.c.0.s8 %v2203
        %v2205 = vperm.slane %v2197, %v2204
        %v2206 = vrot.slane %v2201, 4
        %v2207 = vsel %vm1199, %v2206, %v2189
        %v2208 = vrot.slane %v2189, 4
        %v2209 = vsel %vm1199, %v2201, %v2208
        %v2211 = vunpack.c.l.s4 1934713408
        %v2212 = vunpack.c.0.s8 %v2211
        %v2213 = vperm.slane %v2207, %v2212
        %v2215 = vunpack.c.l.s4 1934713408
        %v2216 = vunpack.c.0.s8 %v2215
        %v2217 = vperm.slane %v2209, %v2216
        %v2218 = vrot.slane %v2205, 4
        %v2219 = vsel %vm1199, %v2218, %v2193
        %v2220 = vrot.slane %v2193, 4
        %v2221 = vsel %vm1199, %v2205, %v2220
        %v2223 = vunpack.c.l.s4 1934713408
        %v2224 = vunpack.c.0.s8 %v2223
        %v2225 = vperm.slane %v2219, %v2224
        %v2227 = vunpack.c.l.s4 1934713408
        %v2228 = vunpack.c.0.s8 %v2227
        %v2229 = vperm.slane %v2221, %v2228
        %v2230 = vrot.slane %v2213, 4
        %v2231 = vsel %vm1199, 0.0, %v2230
        %v2232 = vrot.slane %v2217, 4
        %v2233 = vsel %vm1199, 0.0, %v2232
        %v2234 = vrot.slane %v2225, 4
        %v2235 = vsel %vm1199, 0.0, %v2234
        %v2236 = vrot.slane %v2229, 4
        %v2237 = vsel %vm1199, 0.0, %v2236
        %v2238 = vsel %vm1199, %v2232, %v2213
        %v2240 = vunpack.c.l.s4 1983009808
        %v2241 = vunpack.c.0.s8 %v2240
        %v2242 = vperm.slane %v2238, %v2241
        %v2243 = vrot.slane %v2233, 4
        %v2244 = vsel %vm1199, %v2243, %v2231
        %v2246 = vunpack.c.l.s4 1983009808
        %v2247 = vunpack.c.0.s8 %v2246
        %v2248 = vperm.slane %v2244, %v2247
        %v2249 = vsel %vm1199, %v2236, %v2225
        %v2251 = vunpack.c.l.s4 1983009808
        %v2252 = vunpack.c.0.s8 %v2251
        %v2253 = vperm.slane %v2249, %v2252
        %v2254 = vrot.slane %v2237, 4
        %v2255 = vsel %vm1199, %v2254, %v2235
        %v2257 = vunpack.c.l.s4 1983009808
        %v2258 = vunpack.c.0.s8 %v2257
        %v2259 = vperm.slane %v2255, %v2258
        %v2260 = vrot.slane %v2248, 4
        %v2261 = vsel %vm1199, %v2260, %v2242
        %v2262 = vrot.slane %v2242, 4
        %v2263 = vsel %vm1199, %v2248, %v2262
        %v2265 = vunpack.c.l.s4 1934713408
        %v2266 = vunpack.c.0.s8 %v2265
        %v2267 = vperm.slane %v2261, %v2266
        %v2269 = vunpack.c.l.s4 1934713408
        %v2270 = vunpack.c.0.s8 %v2269
        %v2271 = vperm.slane %v2263, %v2270
        %v2272 = vrot.slane %v2259, 4
        %v2273 = vsel %vm1199, %v2272, %v2253
        %v2274 = vrot.slane %v2253, 4
        %v2275 = vsel %vm1199, %v2259, %v2274
        %v2277 = vunpack.c.l.s4 1934713408
        %v2278 = vunpack.c.0.s8 %v2277
        %v2279 = vperm.slane %v2273, %v2278
        %v2281 = vunpack.c.l.s4 1934713408
        %v2282 = vunpack.c.0.s8 %v2281
        %v2283 = vperm.slane %v2275, %v2282
        %v2284 = vrot.slane %v2279, 4
        %v2285 = vsel %vm1199, %v2284, %v2267
        %v2286 = vrot.slane %v2267, 4
        %v2287 = vsel %vm1199, %v2279, %v2286
        %v2288 = vrot.slane %v2283, 4
        %v2289 = vsel %vm1199, %v2288, %v2271
        %v2290 = vrot.slane %v2271, 4
        %v2291 = vsel %vm1199, %v2283, %v2290
        %2293 = vrot.lane.b32.xlu0 %v2287, 8
        %v2294 = vpop.permute.xlu0 %2293
        %2297 = vrot.lane.b32.xlu0 %v2289, 16
        %v2298 = vpop.permute.xlu0 %2297
        %2301 = vrot.lane.b32.xlu0 %v2291, 24
        %v2302 = vpop.permute.xlu0 %2301
        %v2304 = vsel %vm944, %v2285, %v2294
        %v2305 = vsel %vm1322, %v2304, %v2298
        %v2306 = vsel %vm1324, %v2305, %v2302
        %v2307 = vpack.c.bf16 %v2306, %v2306
        %v2309 = vsel %vm511, %v2307, 0
        %2311 = vmatpush.bf16.msra.mxu0 0
        %2312 = vmatpush.bf16.msra.mxu0 0
        %2313 = vmatpush.bf16.msra.mxu0 0
        %2314 = vmatpush.bf16.msra.mxu0 0
        %2315 = vmatpush.bf16.msra.mxu0 0
        %2316 = vmatpush.bf16.msra.mxu0 0
        %2317 = vmatpush.bf16.msra.mxu0 %v1337
        %2318 = vmatpush.bf16.msra.mxu0 %v1336
        %2319 = vmatmul.bf16.gmra.mxu0 %v2309
        %v2320 = vpop.f32.mrf.mxu0
        %v2321 = vadd.f32 %v1327, %v2320
        %v2322 = vpop.f32.mrf.mxu0
        %2323 = vdwg.mxu0
        %v2324 = vadd.f32 %v1522, %v2321
        // Predicated region
        $region61: #{tpu_custom_call.1} parent=51 // pred_check
          %p2325 = pneg %p1357
        $region62: #{tpu_custom_call.1} parent=51 // pred_check_branch
          %2327 = sbr.rel (%p2325) target = $region64
        $region63: #{tpu_custom_call.1} parent=51 // pred_region
          %v2328 = vsel %vm944, %v2056, 0.0
          %v2329 = vsel %vm944, %v2071, 0.0
          %v2330 = vadd.f32 %v2328, %v2329
          %v2331 = vsel %vm944, %v2086, 0.0
          %v2332 = vadd.f32 %v2330, %v2331
          %v2333 = vsel %vm944, %v2101, 0.0
          %v2334 = vadd.f32 %v2332, %v2333
          %v2335 = vrcp.pop 4.0
          %v2336 = vmul.f32 4.0, %v2335
          %v2337 = vsub.f32 1.0, %v2336
          %v2338 = vmul.f32 %v2335, %v2337
          %v2339 = vadd.f32 %v2335, %v2338
          %vm2340 = vweird.f32 %v2335
          %v2341 = vsel %vm2340, %v2335, %v2339
          %v2342 = vmul.f32 %v2334, %v2341
          %s2343 = scalar_lea.vmem [#allocation4], 8
          %2344 = vst.msk [vmem:[%s2343] sm:$0xff] %vm944, %v2342
        $region64: #{tpu_custom_call.1} parent=51 // pred_fallthru
          _
        %v2345 = vsel %vm511, %v2324, 0.0
        %2346 = vadd.xlane.f32.xlu0 %v2345
        %v2347 = vpop.xlane.xlu0 %2346
        %v2348 = vmul.f32 %v2347, %v521
        %v2349 = vsub.f32 %v2324, %v2348
        %v2350 = vmul.f32 %v2349, %v2349
        %v2351 = vsel %vm511, %v2350, 0.0
        %2352 = vadd.xlane.f32.xlu0 %v2351
        %v2353 = vpop.xlane.xlu0 %2352
        %v2354 = vmul.f32 %v2353, %v521
        %v2355 = vadd.f32 %v2354, 1e-05
        %v2356 = vrsqrt.pop %v2355
        %v2357 = vmul.f32 %v2356, %v2355
        %v2358 = vmul.f32 %v2357, %v2356
        %v2359 = vmul.f32 0.5, %v2358
        %v2360 = vsub.f32 1.5, %v2359
        %v2361 = vmul.f32 %v2356, %v2360
        %vm2362 = vweird.f32 %v2355
        %vm2363 = vweird.f32 %v2356
        %vm2364 = vmor %vm2362, %vm2363
        %v2365 = vsel %vm2364, %v2356, %v2361
        %v2366 = vmul.f32 %v2349, %v2365
        %v2367 = vmul.f32 %v2366, %v1399
        %v2368 = vadd.f32 %v2367, %v1401
        %v2369 = vpack.c.bf16 %v2368, %v2368
        %v2371 = vsel %vm511, %v2369, 0
        %2373 = vmatpush.bf16.msra.mxu0 0
        %2374 = vmatpush.bf16.msra.mxu0 0
        %2375 = vmatpush.bf16.msra.mxu0 0
        %2376 = vmatpush.bf16.msra.mxu0 0
        %2377 = vmatpush.bf16.msra.mxu0 0
        %2378 = vmatpush.bf16.msra.mxu0 0
        %2379 = vmatpush.bf16.msra.mxu0 %v1416
        %2380 = vmatpush.bf16.msra.mxu0 %v1415
        %2381 = vmatmul.bf16.gmra.mxu0 %v2371
        %v2382 = vpop.f32.mrf.mxu0
        %v2383 = vadd.f32 %v1405, %v2382
        %v2384 = vpop.f32.mrf.mxu0
        %2385 = vdwg.mxu0
        %v2386 = vmul.f32 %v2383, 1.702
        %v2387 = vxor.u32 %v2386, 2147483648
        %v2388 = vmul.f32 %v2387, 1.442695
        %v2389 = vpow.pop %v2388
        %v2390 = vadd.f32 %v2389, 1.0
        %v2391 = vrcp.pop %v2390
        %v2392 = vmul.f32 %v2390, %v2391
        %v2393 = vsub.f32 1.0, %v2392
        %v2394 = vmul.f32 %v2391, %v2393
        %v2395 = vadd.f32 %v2391, %v2394
        %vm2396 = vweird.f32 %v2390
        %vm2397 = vweird.f32 %v2391
        %vm2398 = vmor %vm2396, %vm2397
        %v2399 = vsel %vm2398, %v2391, %v2395
        %v2400 = vand.u32 2147483647, %v2390
        %vm2401 = vcmp.eq.f32.partialorder %v2400, 8.507059e+37
        %v2402 = vand.u32 %v2390, 2147483648
        %v2403 = vor.u32 1.1754944e-38, %v2402
        %v2404 = vsel %vm2401, %v2403, %v2399
        %v2405 = vmul.f32 1.0, %v2404
        %v2406 = vmul.f32 %v2383, %v2405
        %v2407 = vpack.c.bf16 %v2406, %v2406
        %2408 = vmatpush.bf16.msra.mxu0 %v1497
        %2409 = vmatpush.bf16.msra.mxu0 %v1496
        %2410 = vmatpush.bf16.msra.mxu0 %v1495
        %2411 = vmatpush.bf16.msra.mxu0 %v1494
        %2412 = vmatpush.bf16.msra.mxu0 %v1493
        %2413 = vmatpush.bf16.msra.mxu0 %v1492
        %2414 = vmatpush.bf16.msra.mxu0 %v1491
        %2415 = vmatpush.bf16.msra.mxu0 %v1490
        %2416 = vmatmul.bf16.gmra.mxu0 %v2407
        %v2417 = vpop.f32.mrf.mxu0
        %v2418 = vadd.f32 %v1457, %v2417
        %v2419 = vpop.f32.mrf.mxu0
        %2420 = vdwg.mxu0
        %v2421 = vadd.f32 %v2324, %v2418
        %2422 = vst.msk [vmem:[%s1521] sm:$0xff] %vm511, %v2421
        // Predicated region
        $region65: #{tpu_custom_call.1} parent=51 // pred_check
          %p2423 = pneg %p261
        $region66: #{tpu_custom_call.1} parent=51 // pred_check_branch
          %2425 = sbr.rel (%p2423) target = $region68
        $region67: #{tpu_custom_call.1} parent=51 // pred_region
          %s2426 = smul.u32 2, %s27
          %2428 = vsyncadd [#allocation3], 0
          %s2429 = smul.addr %s2426, 8
          %s2430 = scalar_lea.hbm %s8, %s2429
          %s2431 = sshll.u32 [#allocation2], 4
          %s2432 = int_to_ptr.vmem [resolvable:$true] %s2431
          %s2433 = sshll.u32 %s2430, 4
          %s2434 = int_to_ptr.hbm [resolvable:$true] %s2433
          %2439 = dma.vmem_to_hbm [thread:$0]  %s2432, 256, %s2434, [#allocation3], 128, 128, 8
        $region68: #{tpu_custom_call.1} parent=51 // pred_fallthru
          _
        // Predicated region
        $region69: #{tpu_custom_call.1} parent=51 // pred_check
          %p2440 = pneg %p287
        $region70: #{tpu_custom_call.1} parent=51 // pred_check_branch
          %2442 = sbr.rel (%p2440) target = $region72
        $region71: #{tpu_custom_call.1} parent=51 // pred_region
          %s2443 = smul.u32 2, %s27
          %2445 = vsyncadd [#allocation5], 0
          %s2446 = smul.addr %s2443, 8
          %s2447 = scalar_lea.hbm %s9, %s2446
          %s2448 = sshll.u32 [#allocation4], 4
          %s2449 = int_to_ptr.vmem [resolvable:$true] %s2448
          %s2450 = sshll.u32 %s2447, 4
          %s2451 = int_to_ptr.hbm [resolvable:$true] %s2450
          %2456 = dma.vmem_to_hbm [thread:$0]  %s2449, 256, %s2451, [#allocation5], 128, 128, 8
        $region72: #{tpu_custom_call.1} parent=51 // pred_fallthru
          _
        // Predicated region
        $region73: #{tpu_custom_call.1} parent=51 // pred_check
          %p2457 = pneg %p261
        $region74: #{tpu_custom_call.1} parent=51 // pred_check_branch
          %2459 = sbr.rel (%p2457) target = $region76
        $region75: #{tpu_custom_call.1} parent=51 // pred_region
          %2461 = dma.done [#allocation3], 256
        $region76: #{tpu_custom_call.1} parent=51 // pred_fallthru
          _
        // Predicated region
        $region77: #{tpu_custom_call.1} parent=51 // pred_check
          %p2462 = pneg %p287
        $region78: #{tpu_custom_call.1} parent=51 // pred_check_branch
          %2464 = sbr.rel (%p2462) target = $region80
        $region79: #{tpu_custom_call.1} parent=51 // pred_region
          %2466 = dma.done [#allocation5], 256
        $region80: #{tpu_custom_call.1} parent=51 // pred_fallthru
          _
      $region52: #{tpu_custom_call.1} parent=5 // pred_fallthru
        _
      %p2467 = scmp.le.s32.totalorder 2, %s18
      // Predicated region
      $region81: #{tpu_custom_call.1} parent=5 // pred_check
        %p2468 = pneg %p2467
      $region82: #{tpu_custom_call.1} parent=5 // pred_check_branch
        %2470 = sbr.rel (%p2468) target = $region84
      $region83: #{tpu_custom_call.1} parent=5 // pred_region
        %s2471 = ssub.s32 %s18, 2
      $region84: #{tpu_custom_call.1} parent=5 // pred_fallthru
        _
    $region6: #{tpu_custom_call.1} parent=1 // loop_footer
      %s22 = sadd.s32 1, %s18
    $region7: #{tpu_custom_call.1} parent=1 // loop_footer_branch
      %17 = sbr.rel target = $region3
    $region8: #{tpu_custom_call.1} parent=1 // loop_exit
      _
    %2472 = vsyncpa [#allocation3], 1
    %s2473 = scalar_lea.sflag [#allocation3], 1
    %2474 = vsyncpa %s2473, 1
    %2475 = vsyncpa [#allocation5], 1

</llo_original>
